<compile_context>
chip_gen: v7x
topology: tpu7x:2x2x1
jax: 0.10.0
libtpu: 0.0.40
codegen_flags: <defaults>
</compile_context>

<pallas_src>
import functools

import jax
import jax.numpy as jnp
from jax import lax
from jax.experimental import pallas as pl
from jax.experimental.pallas import tpu as pltpu


def _stage_taps(patch_ref, flat, mask_l, mask_r, C, W, HW, pad):
    """Write the 9 shifted 3x3-conv taps (bf16) into the im2col scratch.

    flat : (C, HW + 2*pad) bf16 value — zero-padded flattened image, pad = W+1.
           Row over/underflow of a tap lands in the zero pad; only column
           wrap-around (dx = +/-1 at the row edges) needs masking.
    Tap t = dy*3 + dx occupies scratch rows [t*C, (t+1)*C), matching the
    tap-major (C_out, 9*C_in) weight slab produced by the wrapper.
    """
    for dy in range(3):
        for dx in range(3):
            oy, ox = dy - 1, dx - 1
            start = pad + oy * W + ox
            tap = flat[:, start:start + HW]                      # (C, HW) bf16
            if ox == -1:      # column 0 has no left neighbor
                tap = jnp.where(mask_l, tap, jnp.bfloat16(0))
            elif ox == 1:     # column W-1 has no right neighbor
                tap = jnp.where(mask_r, tap, jnp.bfloat16(0))
            t = dy * 3 + dx
            patch_ref[t * C:(t + 1) * C, :] = tap                # aligned dense store


def cab_kernel(x_ref, col_ref, w1_ref, w2_ref, wd_ref, wu_ref, o_ref, patch_ref,
               *, W):
    # x_ref   : (1, C, HW)  f32 input image, spatial flattened onto lanes
    # col_ref : (1, HW)     i32 column index of each lane (p % W)
    # w1_ref  : (C, 9*C)    bf16 conv1 weights, tap-major
    # w2_ref  : (C, 9*C)    bf16 conv2 weights, tap-major
    # wd_ref  : (C//r, C)   f32 CA 1x1 squeeze weights
    # wu_ref  : (C, C//r)   f32 CA 1x1 excite weights
    # o_ref   : (1, C, HW)  f32 output
    # patch_ref: (9*C, HW)  bf16 VMEM im2col scratch (reused by both convs)
    C, HW = x_ref.shape[1], x_ref.shape[2]
    pad = W + 1

    col = col_ref[...]                      # (1, HW) int32
    mask_l = col > 0                        # hoisted out of the tap loops
    mask_r = col < (W - 1)
    zpad = jnp.zeros((C, pad), jnp.bfloat16)

    # ---- conv1: im2col -> one (C,9C)@(9C,HW) bf16 matmul (f32 acc) -> ReLU ----
    flat1 = jnp.concatenate([zpad, x_ref[0].astype(jnp.bfloat16), zpad], axis=1)
    _stage_taps(patch_ref, flat1, mask_l, mask_r, C, W, HW, pad)
    h1 = jnp.dot(w1_ref[...], patch_ref[...], preferred_element_type=jnp.float32)
    h1 = jnp.maximum(h1, 0.0)               # act = ReLU (f32, VPU)

    # ---- conv2: same, reusing the scratch -------------------------------------
    flat2 = jnp.concatenate([zpad, h1.astype(jnp.bfloat16), zpad], axis=1)
    _stage_taps(patch_ref, flat2, mask_l, mask_r, C, W, HW, pad)
    r = jnp.dot(w2_ref[...], patch_ref[...], preferred_element_type=jnp.float32)

    # ---- channel attention (CALayer) ------------------------------------------
    pooled = jnp.mean(r, axis=1, keepdims=True)                         # (C, 1)
    y = jnp.maximum(jnp.dot(wd_ref[...], pooled,
                            preferred_element_type=jnp.float32), 0.0)   # (Cr, 1)
    attn = jax.nn.sigmoid(jnp.dot(wu_ref[...], y,
                                  preferred_element_type=jnp.float32))  # (C, 1)

    # ---- scale + residual (residual re-read from the ref: short live range) ---
    o_ref[0] = r * attn + x_ref[0]


def cab_forward(x_nchw, w1_hwio, w2_hwio, wd, wu):
    """CAB forward.

    x_nchw  : (B, C, H, W) f32
    w1/w2   : (3, 3, C, C) HWIO 3x3 conv weights (bias=False)
    wd      : (C//r, C)  CA squeeze 1x1 conv weight (PyTorch (C//r, C, 1, 1) squeezed)
    wu      : (C, C//r)  CA excite 1x1 conv weight
    """
    B, C, H, W = x_nchw.shape
    HW = H * W
    Cr = wd.shape[0]

    x = x_nchw.reshape(B, C, HW).astype(jnp.float32)   # free: NCHW is spatial-minor
    # Tap-major bf16 weight slabs: w_r[co, (dy*3+dx)*C + ci] = w[dy, dx, ci, co]
    w1r = jnp.transpose(w1_hwio, (3, 0, 1, 2)).reshape(C, 9 * C).astype(jnp.bfloat16)
    w2r = jnp.transpose(w2_hwio, (3, 0, 1, 2)).reshape(C, 9 * C).astype(jnp.bfloat16)
    col_ids = (jnp.arange(HW, dtype=jnp.int32) % W).reshape(1, HW)

    kernel = functools.partial(cab_kernel, W=W)
    out = pl.pallas_call(
        kernel,
        out_shape=jax.ShapeDtypeStruct((B, C, HW), jnp.float32),
        grid_spec=pltpu.PrefetchScalarGridSpec(
            num_scalar_prefetch=0,
            grid=(B,),
            in_specs=[
                pl.BlockSpec((1, C, HW), lambda b: (b, 0, 0)),   # x
                pl.BlockSpec((1, HW), lambda b: (0, 0)),         # column ids
                pl.BlockSpec((C, 9 * C), lambda b: (0, 0)),      # conv1 weights
                pl.BlockSpec((C, 9 * C), lambda b: (0, 0)),      # conv2 weights
                pl.BlockSpec((Cr, C), lambda b: (0, 0)),         # CA squeeze
                pl.BlockSpec((C, Cr), lambda b: (0, 0)),         # CA excite
            ],
            out_specs=pl.BlockSpec((1, C, HW), lambda b: (b, 0, 0)),
            scratch_shapes=[pltpu.VMEM((9 * C, HW), jnp.bfloat16)],  # im2col patch
        ),
        compiler_params=pltpu.CompilerParams(dimension_semantics=("parallel",)),
    )(x, col_ids, w1r, w2r, wd.astype(jnp.float32), wu.astype(jnp.float32))

    return out.reshape(B, C, H, W)


def cab_reference(x_nchw, w1_hwio, w2_hwio, wd, wu):
    """Pure-JAX NCHW reference (conv operands rounded to bf16 like the kernel)."""
    bf = lambda a: a.astype(jnp.bfloat16).astype(jnp.float32)
    dn = ('NCHW', 'HWIO', 'NCHW')
    hi = lax.Precision.HIGHEST
    h = lax.conv_general_dilated(bf(x_nchw), bf(w1_hwio), (1, 1), 'SAME',
                                 dimension_numbers=dn, precision=hi)
    h = jnp.maximum(h, 0.0)
    r = lax.conv_general_dilated(bf(h), bf(w2_hwio), (1, 1), 'SAME',
                                 dimension_numbers=dn, precision=hi)
    pooled = jnp.mean(r, axis=(2, 3), keepdims=True)                 # (B, C, 1, 1)
    y = jnp.maximum(jnp.einsum('rc,bcij->brij', wd, pooled, precision=hi), 0.0)
    attn = jax.nn.sigmoid(jnp.einsum('cr,brij->bcij', wu, y, precision=hi))
    return r * attn + x_nchw


if __name__ == "__main__":
    # CAB(n_feat=32, kernel_size=3, reduction=4, bias=False, act=ReLU)
    B, C, H, W = 2, 32, 16, 16
    reduction = 4
    Cr = C // reduction

    key = jax.random.PRNGKey(0)
    k0, k1, k2, k3, k4 = jax.random.split(key, 5)

    x = jax.random.normal(k0, (B, C, H, W), jnp.float32)
    w1 = jax.random.normal(k1, (3, 3, C, C), jnp.float32) * 0.05   # HWIO
    w2 = jax.random.normal(k2, (3, 3, C, C), jnp.float32) * 0.05   # HWIO
    wd = jax.random.normal(k3, (Cr, C), jnp.float32) * 0.1         # 1x1 squeeze
    wu = jax.random.normal(k4, (C, Cr), jnp.float32) * 0.1         # 1x1 excite

    cab = jax.jit(cab_forward)
    out = jax.block_until_ready(cab(x, w1, w2, wd, wu))

    ref = cab_reference(x, w1, w2, wd, wu)
    assert out.shape == x.shape
    max_err = float(jnp.max(jnp.abs(out - ref)))
    assert jnp.allclose(out, ref, atol=1e-2, rtol=1e-2), \
        f"mismatch vs reference (max abs err {max_err})"

    print("KERNEL_OK")
</pallas_src>

<mosaic_0001>
module attributes {stable_mosaic.version = 11 : i64} {
  func.func @cab_kernel(%arg0: i32, %arg1: memref<1x32x256xf32, #tpu.memory_space<vmem>>, %arg2: memref<1x256xi32, #tpu.memory_space<vmem>>, %arg3: memref<32x288xbf16, #tpu.memory_space<vmem>>, %arg4: memref<32x288xbf16, #tpu.memory_space<vmem>>, %arg5: memref<8x32xf32, #tpu.memory_space<vmem>>, %arg6: memref<32x8xf32, #tpu.memory_space<vmem>>, %arg7: memref<1x32x256xf32, #tpu.memory_space<vmem>>, %arg8: memref<288x256xbf16, #tpu.memory_space<vmem>>) attributes {dimension_semantics = [#tpu.dimension_semantics<parallel>], iteration_bounds = array<i64: 2>, scalar_prefetch = 0 : i64, scratch_operands = 1 : i64, tpu.core_type = #tpu.core_type<tc>, window_params = [{transform_indices = @transform_0, window_bounds = array<i64: 1, 32, 256>}, {pipeline_mode = #tpu.pipeline_mode<synchronous>, transform_indices = @transform_1, window_bounds = array<i64: 1, 256>}, {pipeline_mode = #tpu.pipeline_mode<synchronous>, transform_indices = @transform_2, window_bounds = array<i64: 32, 288>}, {pipeline_mode = #tpu.pipeline_mode<synchronous>, transform_indices = @transform_3, window_bounds = array<i64: 32, 288>}, {pipeline_mode = #tpu.pipeline_mode<synchronous>, transform_indices = @transform_4, window_bounds = array<i64: 8, 32>}, {pipeline_mode = #tpu.pipeline_mode<synchronous>, transform_indices = @transform_5, window_bounds = array<i64: 32, 8>}, {transform_indices = @transform_6, window_bounds = array<i64: 1, 32, 256>}]} {
    %c0 = arith.constant 0 : index
    %c0_0 = arith.constant 0 : index
    %0 = vector.load %arg2[%c0, %c0_0] : memref<1x256xi32, #tpu.memory_space<vmem>>, vector<1x256xi32>
    %c0_i32 = arith.constant 0 : i32
    %1 = vector.broadcast %c0_i32 : i32 to vector<1x256xi32>
    %2 = arith.cmpi sgt, %0, %1 : vector<1x256xi32>
    %c15_i32 = arith.constant 15 : i32
    %3 = vector.broadcast %c15_i32 : i32 to vector<1x256xi32>
    %4 = arith.cmpi slt, %0, %3 : vector<1x256xi32>
    %cst = arith.constant 0.000000e+00 : bf16
    %5 = vector.broadcast %cst : bf16 to vector<32x17xbf16>
    %c0_1 = arith.constant 0 : index
    %c0_2 = arith.constant 0 : index
    %c0_3 = arith.constant 0 : index
    %6 = vector.load %arg1[%c0_1, %c0_2, %c0_3] : memref<1x32x256xf32, #tpu.memory_space<vmem>>, vector<1x32x256xf32>
    %7 = vector.shape_cast %6 : vector<1x32x256xf32> to vector<32x256xf32>
    %8 = arith.truncf %7 : vector<32x256xf32> to vector<32x256xbf16>
    %9 = tpu.concatenate %5, %8, %5 in 1 : vector<32x17xbf16>, vector<32x256xbf16>, vector<32x17xbf16> -> vector<32x290xbf16>
    %10 = vector.extract_strided_slice %9 {offsets = [0, 0], sizes = [32, 256], strides = [1, 1]} : vector<32x290xbf16> to vector<32x256xbf16>
    %cst_4 = arith.constant 0.000000e+00 : bf16
    %11 = vector.shape_cast %2 : vector<1x256xi1> to vector<1x256xi1>
    %12 = vector.broadcast %11 : vector<1x256xi1> to vector<32x256xi1>
    %13 = vector.broadcast %cst_4 : bf16 to vector<32x256xbf16>
    %14 = arith.select %12, %10, %13 : vector<32x256xi1>, vector<32x256xbf16>
    %c0_5 = arith.constant 0 : index
    %c0_6 = arith.constant 0 : index
    %15 = vector.load %arg8[%c0_5, %c0_6] : memref<288x256xbf16, #tpu.memory_space<vmem>>, vector<32x256xbf16>
    tpu.vector_store %arg8[%c0_5, %c0_6], %14 {strides = array<i32>} : memref<288x256xbf16, #tpu.memory_space<vmem>>, vector<32x256xbf16>,
    %16 = vector.extract_strided_slice %9 {offsets = [0, 1], sizes = [32, 256], strides = [1, 1]} : vector<32x290xbf16> to vector<32x256xbf16>
    %c32 = arith.constant 32 : index
    %c0_7 = arith.constant 0 : index
    %17 = vector.load %arg8[%c32, %c0_7] : memref<288x256xbf16, #tpu.memory_space<vmem>>, vector<32x256xbf16>
    tpu.vector_store %arg8[%c32, %c0_7], %16 {strides = array<i32>} : memref<288x256xbf16, #tpu.memory_space<vmem>>, vector<32x256xbf16>,
    %18 = vector.extract_strided_slice %9 {offsets = [0, 2], sizes = [32, 256], strides = [1, 1]} : vector<32x290xbf16> to vector<32x256xbf16>
    %cst_8 = arith.constant 0.000000e+00 : bf16
    %19 = vector.shape_cast %4 : vector<1x256xi1> to vector<1x256xi1>
    %20 = vector.broadcast %19 : vector<1x256xi1> to vector<32x256xi1>
    %21 = vector.broadcast %cst_8 : bf16 to vector<32x256xbf16>
    %22 = arith.select %20, %18, %21 : vector<32x256xi1>, vector<32x256xbf16>
    %c64 = arith.constant 64 : index
    %c0_9 = arith.constant 0 : index
    %23 = vector.load %arg8[%c64, %c0_9] : memref<288x256xbf16, #tpu.memory_space<vmem>>, vector<32x256xbf16>
    tpu.vector_store %arg8[%c64, %c0_9], %22 {strides = array<i32>} : memref<288x256xbf16, #tpu.memory_space<vmem>>, vector<32x256xbf16>,
    %24 = vector.extract_strided_slice %9 {offsets = [0, 16], sizes = [32, 256], strides = [1, 1]} : vector<32x290xbf16> to vector<32x256xbf16>
    %cst_10 = arith.constant 0.000000e+00 : bf16
    %25 = vector.shape_cast %2 : vector<1x256xi1> to vector<1x256xi1>
    %26 = vector.broadcast %25 : vector<1x256xi1> to vector<32x256xi1>
    %27 = vector.broadcast %cst_10 : bf16 to vector<32x256xbf16>
    %28 = arith.select %26, %24, %27 : vector<32x256xi1>, vector<32x256xbf16>
    %c96 = arith.constant 96 : index
    %c0_11 = arith.constant 0 : index
    %29 = vector.load %arg8[%c96, %c0_11] : memref<288x256xbf16, #tpu.memory_space<vmem>>, vector<32x256xbf16>
    tpu.vector_store %arg8[%c96, %c0_11], %28 {strides = array<i32>} : memref<288x256xbf16, #tpu.memory_space<vmem>>, vector<32x256xbf16>,
    %30 = vector.extract_strided_slice %9 {offsets = [0, 17], sizes = [32, 256], strides = [1, 1]} : vector<32x290xbf16> to vector<32x256xbf16>
    %c128 = arith.constant 128 : index
    %c0_12 = arith.constant 0 : index
    %31 = vector.load %arg8[%c128, %c0_12] : memref<288x256xbf16, #tpu.memory_space<vmem>>, vector<32x256xbf16>
    tpu.vector_store %arg8[%c128, %c0_12], %30 {strides = array<i32>} : memref<288x256xbf16, #tpu.memory_space<vmem>>, vector<32x256xbf16>,
    %32 = vector.extract_strided_slice %9 {offsets = [0, 18], sizes = [32, 256], strides = [1, 1]} : vector<32x290xbf16> to vector<32x256xbf16>
    %cst_13 = arith.constant 0.000000e+00 : bf16
    %33 = vector.shape_cast %4 : vector<1x256xi1> to vector<1x256xi1>
    %34 = vector.broadcast %33 : vector<1x256xi1> to vector<32x256xi1>
    %35 = vector.broadcast %cst_13 : bf16 to vector<32x256xbf16>
    %36 = arith.select %34, %32, %35 : vector<32x256xi1>, vector<32x256xbf16>
    %c160 = arith.constant 160 : index
    %c0_14 = arith.constant 0 : index
    %37 = vector.load %arg8[%c160, %c0_14] : memref<288x256xbf16, #tpu.memory_space<vmem>>, vector<32x256xbf16>
    tpu.vector_store %arg8[%c160, %c0_14], %36 {strides = array<i32>} : memref<288x256xbf16, #tpu.memory_space<vmem>>, vector<32x256xbf16>,
    %38 = vector.extract_strided_slice %9 {offsets = [0, 32], sizes = [32, 256], strides = [1, 1]} : vector<32x290xbf16> to vector<32x256xbf16>
    %cst_15 = arith.constant 0.000000e+00 : bf16
    %39 = vector.shape_cast %2 : vector<1x256xi1> to vector<1x256xi1>
    %40 = vector.broadcast %39 : vector<1x256xi1> to vector<32x256xi1>
    %41 = vector.broadcast %cst_15 : bf16 to vector<32x256xbf16>
    %42 = arith.select %40, %38, %41 : vector<32x256xi1>, vector<32x256xbf16>
    %c192 = arith.constant 192 : index
    %c0_16 = arith.constant 0 : index
    %43 = vector.load %arg8[%c192, %c0_16] : memref<288x256xbf16, #tpu.memory_space<vmem>>, vector<32x256xbf16>
    tpu.vector_store %arg8[%c192, %c0_16], %42 {strides = array<i32>} : memref<288x256xbf16, #tpu.memory_space<vmem>>, vector<32x256xbf16>,
    %44 = vector.extract_strided_slice %9 {offsets = [0, 33], sizes = [32, 256], strides = [1, 1]} : vector<32x290xbf16> to vector<32x256xbf16>
    %c224 = arith.constant 224 : index
    %c0_17 = arith.constant 0 : index
    %45 = vector.load %arg8[%c224, %c0_17] : memref<288x256xbf16, #tpu.memory_space<vmem>>, vector<32x256xbf16>
    tpu.vector_store %arg8[%c224, %c0_17], %44 {strides = array<i32>} : memref<288x256xbf16, #tpu.memory_space<vmem>>, vector<32x256xbf16>,
    %46 = vector.extract_strided_slice %9 {offsets = [0, 34], sizes = [32, 256], strides = [1, 1]} : vector<32x290xbf16> to vector<32x256xbf16>
    %cst_18 = arith.constant 0.000000e+00 : bf16
    %47 = vector.shape_cast %4 : vector<1x256xi1> to vector<1x256xi1>
    %48 = vector.broadcast %47 : vector<1x256xi1> to vector<32x256xi1>
    %49 = vector.broadcast %cst_18 : bf16 to vector<32x256xbf16>
    %50 = arith.select %48, %46, %49 : vector<32x256xi1>, vector<32x256xbf16>
    %c256 = arith.constant 256 : index
    %c0_19 = arith.constant 0 : index
    %51 = vector.load %arg8[%c256, %c0_19] : memref<288x256xbf16, #tpu.memory_space<vmem>>, vector<32x256xbf16>
    tpu.vector_store %arg8[%c256, %c0_19], %50 {strides = array<i32>} : memref<288x256xbf16, #tpu.memory_space<vmem>>, vector<32x256xbf16>,
    %c0_20 = arith.constant 0 : index
    %c0_21 = arith.constant 0 : index
    %52 = vector.load %arg3[%c0_20, %c0_21] : memref<32x288xbf16, #tpu.memory_space<vmem>>, vector<32x288xbf16>
    %c0_22 = arith.constant 0 : index
    %c0_23 = arith.constant 0 : index
    %53 = vector.load %arg8[%c0_22, %c0_23] : memref<288x256xbf16, #tpu.memory_space<vmem>>, vector<288x256xbf16>
    %cst_24 = arith.constant dense<0.000000e+00> : vector<32x256xf32>
    %54 = tpu.matmul %52, %53, %cst_24 {dimension_numbers = #tpu.dot_dimension_numbers<[1], [0], [0], [1], [0, 0, 1, 1], [], []>} : vector<32x288xbf16>, vector<288x256xbf16>, vector<32x256xf32> -> vector<32x256xf32>
    %cst_25 = arith.constant 0.000000e+00 : f32
    %55 = vector.broadcast %cst_25 : f32 to vector<32x256xf32>
    %56 = arith.maximumf %54, %55 : vector<32x256xf32>
    %57 = arith.truncf %56 : vector<32x256xf32> to vector<32x256xbf16>
    %58 = tpu.concatenate %5, %57, %5 in 1 : vector<32x17xbf16>, vector<32x256xbf16>, vector<32x17xbf16> -> vector<32x290xbf16>
    %59 = vector.extract_strided_slice %58 {offsets = [0, 0], sizes = [32, 256], strides = [1, 1]} : vector<32x290xbf16> to vector<32x256xbf16>
    %cst_26 = arith.constant 0.000000e+00 : bf16
    %60 = vector.shape_cast %2 : vector<1x256xi1> to vector<1x256xi1>
    %61 = vector.broadcast %60 : vector<1x256xi1> to vector<32x256xi1>
    %62 = vector.broadcast %cst_26 : bf16 to vector<32x256xbf16>
    %63 = arith.select %61, %59, %62 : vector<32x256xi1>, vector<32x256xbf16>
    %c0_27 = arith.constant 0 : index
    %c0_28 = arith.constant 0 : index
    %64 = vector.load %arg8[%c0_27, %c0_28] : memref<288x256xbf16, #tpu.memory_space<vmem>>, vector<32x256xbf16>
    tpu.vector_store %arg8[%c0_27, %c0_28], %63 {strides = array<i32>} : memref<288x256xbf16, #tpu.memory_space<vmem>>, vector<32x256xbf16>,
    %65 = vector.extract_strided_slice %58 {offsets = [0, 1], sizes = [32, 256], strides = [1, 1]} : vector<32x290xbf16> to vector<32x256xbf16>
    %c32_29 = arith.constant 32 : index
    %c0_30 = arith.constant 0 : index
    %66 = vector.load %arg8[%c32_29, %c0_30] : memref<288x256xbf16, #tpu.memory_space<vmem>>, vector<32x256xbf16>
    tpu.vector_store %arg8[%c32_29, %c0_30], %65 {strides = array<i32>} : memref<288x256xbf16, #tpu.memory_space<vmem>>, vector<32x256xbf16>,
    %67 = vector.extract_strided_slice %58 {offsets = [0, 2], sizes = [32, 256], strides = [1, 1]} : vector<32x290xbf16> to vector<32x256xbf16>
    %cst_31 = arith.constant 0.000000e+00 : bf16
    %68 = vector.shape_cast %4 : vector<1x256xi1> to vector<1x256xi1>
    %69 = vector.broadcast %68 : vector<1x256xi1> to vector<32x256xi1>
    %70 = vector.broadcast %cst_31 : bf16 to vector<32x256xbf16>
    %71 = arith.select %69, %67, %70 : vector<32x256xi1>, vector<32x256xbf16>
    %c64_32 = arith.constant 64 : index
    %c0_33 = arith.constant 0 : index
    %72 = vector.load %arg8[%c64_32, %c0_33] : memref<288x256xbf16, #tpu.memory_space<vmem>>, vector<32x256xbf16>
    tpu.vector_store %arg8[%c64_32, %c0_33], %71 {strides = array<i32>} : memref<288x256xbf16, #tpu.memory_space<vmem>>, vector<32x256xbf16>,
    %73 = vector.extract_strided_slice %58 {offsets = [0, 16], sizes = [32, 256], strides = [1, 1]} : vector<32x290xbf16> to vector<32x256xbf16>
    %cst_34 = arith.constant 0.000000e+00 : bf16
    %74 = vector.shape_cast %2 : vector<1x256xi1> to vector<1x256xi1>
    %75 = vector.broadcast %74 : vector<1x256xi1> to vector<32x256xi1>
    %76 = vector.broadcast %cst_34 : bf16 to vector<32x256xbf16>
    %77 = arith.select %75, %73, %76 : vector<32x256xi1>, vector<32x256xbf16>
    %c96_35 = arith.constant 96 : index
    %c0_36 = arith.constant 0 : index
    %78 = vector.load %arg8[%c96_35, %c0_36] : memref<288x256xbf16, #tpu.memory_space<vmem>>, vector<32x256xbf16>
    tpu.vector_store %arg8[%c96_35, %c0_36], %77 {strides = array<i32>} : memref<288x256xbf16, #tpu.memory_space<vmem>>, vector<32x256xbf16>,
    %79 = vector.extract_strided_slice %58 {offsets = [0, 17], sizes = [32, 256], strides = [1, 1]} : vector<32x290xbf16> to vector<32x256xbf16>
    %c128_37 = arith.constant 128 : index
    %c0_38 = arith.constant 0 : index
    %80 = vector.load %arg8[%c128_37, %c0_38] : memref<288x256xbf16, #tpu.memory_space<vmem>>, vector<32x256xbf16>
    tpu.vector_store %arg8[%c128_37, %c0_38], %79 {strides = array<i32>} : memref<288x256xbf16, #tpu.memory_space<vmem>>, vector<32x256xbf16>,
    %81 = vector.extract_strided_slice %58 {offsets = [0, 18], sizes = [32, 256], strides = [1, 1]} : vector<32x290xbf16> to vector<32x256xbf16>
    %cst_39 = arith.constant 0.000000e+00 : bf16
    %82 = vector.shape_cast %4 : vector<1x256xi1> to vector<1x256xi1>
    %83 = vector.broadcast %82 : vector<1x256xi1> to vector<32x256xi1>
    %84 = vector.broadcast %cst_39 : bf16 to vector<32x256xbf16>
    %85 = arith.select %83, %81, %84 : vector<32x256xi1>, vector<32x256xbf16>
    %c160_40 = arith.constant 160 : index
    %c0_41 = arith.constant 0 : index
    %86 = vector.load %arg8[%c160_40, %c0_41] : memref<288x256xbf16, #tpu.memory_space<vmem>>, vector<32x256xbf16>
    tpu.vector_store %arg8[%c160_40, %c0_41], %85 {strides = array<i32>} : memref<288x256xbf16, #tpu.memory_space<vmem>>, vector<32x256xbf16>,
    %87 = vector.extract_strided_slice %58 {offsets = [0, 32], sizes = [32, 256], strides = [1, 1]} : vector<32x290xbf16> to vector<32x256xbf16>
    %cst_42 = arith.constant 0.000000e+00 : bf16
    %88 = vector.shape_cast %2 : vector<1x256xi1> to vector<1x256xi1>
    %89 = vector.broadcast %88 : vector<1x256xi1> to vector<32x256xi1>
    %90 = vector.broadcast %cst_42 : bf16 to vector<32x256xbf16>
    %91 = arith.select %89, %87, %90 : vector<32x256xi1>, vector<32x256xbf16>
    %c192_43 = arith.constant 192 : index
    %c0_44 = arith.constant 0 : index
    %92 = vector.load %arg8[%c192_43, %c0_44] : memref<288x256xbf16, #tpu.memory_space<vmem>>, vector<32x256xbf16>
    tpu.vector_store %arg8[%c192_43, %c0_44], %91 {strides = array<i32>} : memref<288x256xbf16, #tpu.memory_space<vmem>>, vector<32x256xbf16>,
    %93 = vector.extract_strided_slice %58 {offsets = [0, 33], sizes = [32, 256], strides = [1, 1]} : vector<32x290xbf16> to vector<32x256xbf16>
    %c224_45 = arith.constant 224 : index
    %c0_46 = arith.constant 0 : index
    %94 = vector.load %arg8[%c224_45, %c0_46] : memref<288x256xbf16, #tpu.memory_space<vmem>>, vector<32x256xbf16>
    tpu.vector_store %arg8[%c224_45, %c0_46], %93 {strides = array<i32>} : memref<288x256xbf16, #tpu.memory_space<vmem>>, vector<32x256xbf16>,
    %95 = vector.extract_strided_slice %58 {offsets = [0, 34], sizes = [32, 256], strides = [1, 1]} : vector<32x290xbf16> to vector<32x256xbf16>
    %cst_47 = arith.constant 0.000000e+00 : bf16
    %96 = vector.shape_cast %4 : vector<1x256xi1> to vector<1x256xi1>
    %97 = vector.broadcast %96 : vector<1x256xi1> to vector<32x256xi1>
    %98 = vector.broadcast %cst_47 : bf16 to vector<32x256xbf16>
    %99 = arith.select %97, %95, %98 : vector<32x256xi1>, vector<32x256xbf16>
    %c256_48 = arith.constant 256 : index
    %c0_49 = arith.constant 0 : index
    %100 = vector.load %arg8[%c256_48, %c0_49] : memref<288x256xbf16, #tpu.memory_space<vmem>>, vector<32x256xbf16>
    tpu.vector_store %arg8[%c256_48, %c0_49], %99 {strides = array<i32>} : memref<288x256xbf16, #tpu.memory_space<vmem>>, vector<32x256xbf16>,
    %c0_50 = arith.constant 0 : index
    %c0_51 = arith.constant 0 : index
    %101 = vector.load %arg4[%c0_50, %c0_51] : memref<32x288xbf16, #tpu.memory_space<vmem>>, vector<32x288xbf16>
    %c0_52 = arith.constant 0 : index
    %c0_53 = arith.constant 0 : index
    %102 = vector.load %arg8[%c0_52, %c0_53] : memref<288x256xbf16, #tpu.memory_space<vmem>>, vector<288x256xbf16>
    %cst_54 = arith.constant dense<0.000000e+00> : vector<32x256xf32>
    %103 = tpu.matmul %101, %102, %cst_54 {dimension_numbers = #tpu.dot_dimension_numbers<[1], [0], [0], [1], [0, 0, 1, 1], [], []>} : vector<32x288xbf16>, vector<288x256xbf16>, vector<32x256xf32> -> vector<32x256xf32>
    %cst_55 = arith.constant dense<0.000000e+00> : vector<32xf32>
    %104 = vector.multi_reduction <add>, %103, %cst_55 [1] : vector<32x256xf32> to vector<32xf32>
    %105 = vector.shape_cast %104 : vector<32xf32> to vector<32x1xf32>
    %cst_56 = arith.constant 2.560000e+02 : f32
    %106 = vector.broadcast %cst_56 : f32 to vector<32x1xf32>
    %107 = arith.divf %105, %106 : vector<32x1xf32>
    %c0_57 = arith.constant 0 : index
    %c0_58 = arith.constant 0 : index
    %108 = vector.load %arg5[%c0_57, %c0_58] : memref<8x32xf32, #tpu.memory_space<vmem>>, vector<8x32xf32>
    %cst_59 = arith.constant dense<0.000000e+00> : vector<8x1xf32>
    %109 = tpu.matmul %108, %107, %cst_59 {dimension_numbers = #tpu.dot_dimension_numbers<[1], [0], [0], [1], [0, 0, 1, 1], [], []>} : vector<8x32xf32>, vector<32x1xf32>, vector<8x1xf32> -> vector<8x1xf32>
    %cst_60 = arith.constant 0.000000e+00 : f32
    %110 = vector.broadcast %cst_60 : f32 to vector<8x1xf32>
    %111 = arith.maximumf %109, %110 : vector<8x1xf32>
    %c0_61 = arith.constant 0 : index
    %c0_62 = arith.constant 0 : index
    %112 = vector.load %arg6[%c0_61, %c0_62] : memref<32x8xf32, #tpu.memory_space<vmem>>, vector<32x8xf32>
    %cst_63 = arith.constant dense<0.000000e+00> : vector<32x1xf32>
    %113 = tpu.matmul %112, %111, %cst_63 {dimension_numbers = #tpu.dot_dimension_numbers<[1], [0], [0], [1], [0, 0, 1, 1], [], []>} : vector<32x8xf32>, vector<8x1xf32>, vector<32x1xf32> -> vector<32x1xf32>
    %114 = arith.negf %113 : vector<32x1xf32>
    %115 = math.exp %114 : vector<32x1xf32>
    %cst_64 = arith.constant 1.000000e+00 : f32
    %116 = vector.broadcast %cst_64 : f32 to vector<32x1xf32>
    %117 = arith.addf %116, %115 : vector<32x1xf32>
    %118 = arith.divf %116, %117 : vector<32x1xf32>
    %119 = vector.broadcast %118 : vector<32x1xf32> to vector<32x256xf32>
    %120 = arith.mulf %103, %119 : vector<32x256xf32>
    %c0_65 = arith.constant 0 : index
    %c0_66 = arith.constant 0 : index
    %c0_67 = arith.constant 0 : index
    %121 = vector.load %arg1[%c0_65, %c0_66, %c0_67] : memref<1x32x256xf32, #tpu.memory_space<vmem>>, vector<1x32x256xf32>
    %122 = vector.shape_cast %121 : vector<1x32x256xf32> to vector<32x256xf32>
    %123 = arith.addf %120, %122 : vector<32x256xf32>
    %c0_68 = arith.constant 0 : index
    %c0_69 = arith.constant 0 : index
    %c0_70 = arith.constant 0 : index
    %124 = vector.load %arg7[%c0_68, %c0_69, %c0_70] : memref<1x32x256xf32, #tpu.memory_space<vmem>>, vector<1x32x256xf32>
    %125 = vector.shape_cast %124 : vector<1x32x256xf32> to vector<32x256xf32>
    %126 = vector.shape_cast %123 : vector<32x256xf32> to vector<1x32x256xf32>
    tpu.vector_store %arg7[%c0_68, %c0_69, %c0_70], %126 {strides = array<i32>} : memref<1x32x256xf32, #tpu.memory_space<vmem>>, vector<1x32x256xf32>,
    return
  }
  func.func @transform_0(%arg0: i32) -> (i32, i32, i32) {
    %c0_i32 = arith.constant 0 : i32
    %c0_i32_0 = arith.constant 0 : i32
    %c0_i32_1 = arith.constant 0 : i32
    return %arg0, %c0_i32, %c0_i32_0 : i32, i32, i32
  }
  func.func @transform_1(%arg0: i32) -> (i32, i32) {
    %c0_i32 = arith.constant 0 : i32
    %c0_i32_0 = arith.constant 0 : i32
    %c0_i32_1 = arith.constant 0 : i32
    return %c0_i32, %c0_i32_0 : i32, i32
  }
  func.func @transform_2(%arg0: i32) -> (i32, i32) {
    %c0_i32 = arith.constant 0 : i32
    %c0_i32_0 = arith.constant 0 : i32
    %c0_i32_1 = arith.constant 0 : i32
    return %c0_i32, %c0_i32_0 : i32, i32
  }
  func.func @transform_3(%arg0: i32) -> (i32, i32) {
    %c0_i32 = arith.constant 0 : i32
    %c0_i32_0 = arith.constant 0 : i32
    %c0_i32_1 = arith.constant 0 : i32
    return %c0_i32, %c0_i32_0 : i32, i32
  }
  func.func @transform_4(%arg0: i32) -> (i32, i32) {
    %c0_i32 = arith.constant 0 : i32
    %c0_i32_0 = arith.constant 0 : i32
    %c0_i32_1 = arith.constant 0 : i32
    return %c0_i32, %c0_i32_0 : i32, i32
  }
  func.func @transform_5(%arg0: i32) -> (i32, i32) {
    %c0_i32 = arith.constant 0 : i32
    %c0_i32_0 = arith.constant 0 : i32
    %c0_i32_1 = arith.constant 0 : i32
    return %c0_i32, %c0_i32_0 : i32, i32
  }
  func.func @transform_6(%arg0: i32) -> (i32, i32, i32) {
    %c0_i32 = arith.constant 0 : i32
    %c0_i32_0 = arith.constant 0 : i32
    %c0_i32_1 = arith.constant 0 : i32
    return %arg0, %c0_i32, %c0_i32_0 : i32, i32, i32
  }
}

</mosaic_0001>

<llo_original>
// kernel: cab_forward.1
$region0: #{cab_forward.1}
  #allocation0 [shape = 'u32[]', space=smem, size = 0x4, offset = 0x4, fixed_abs, tag = 'smem constant byte address 0x4 - core index']
  #allocation1 [shape = 'u32[144,128]{1,0:T(1,128)}', space=vmem, size = 0x12000, scoped, tag = 'internal scratch']
  #allocation2 [shape = 'bf16[288,256]{1,0:T(16,128)(2,1)}', space=vmem, size = 0x24000, scoped, tag = 'scratch operand']
  %s0 = inlined_call_operand.vmem [shape: f32[2,32,256], index: 0, kind: input, shape index: {}]
  %s1 = inlined_call_operand.vmem [shape: s32[1,256], index: 1, kind: input, shape index: {}]
  %s2 = inlined_call_operand.vmem [shape: bf16[32,288], index: 2, kind: input, shape index: {}]
  %s3 = inlined_call_operand.vmem [shape: bf16[32,288], index: 3, kind: input, shape index: {}]
  %s4 = inlined_call_operand.vmem [shape: f32[8,32], index: 4, kind: input, shape index: {}]
  %s5 = inlined_call_operand.vmem [shape: f32[32,8], index: 5, kind: input, shape index: {}]
  %s6 = inlined_call_operand.vmem [shape: f32[2,32,256], index: 6, kind: output, shape index: {}]
  %s7 = sld [smem:[#allocation0]]
  $region57: #{cab_forward.1} parent=0
    _
  %s9 = ssub.s32 1, %s7
  %s10 = scalar_select 0, %s9, %s7
  loop: start=0, step=1, limit=4
  $region2: #{cab_forward.1} parent=0 // loop_pre_header
    _
  $region3: #{cab_forward.1} parent=0 // loop_header
    %s12 = sphi 0, %s16
    %p13 = scmp.ge.s32.totalorder %s12, 4
    %s22 = sphi 0, %s24
    %s25 = sphi 0, %s22
    %s26 = sphi 0, %s25
    %s42 = sphi 0, %s26
    %s46 = sphi 0, %s46
    %s48 = sphi 0, %s46
    %s49 = sphi 0, %s48
    %s63 = sphi 0, %s49
    %s67 = sphi 0, %s67
    %s69 = sphi 0, %s67
    %s70 = sphi 0, %s69
    %s84 = sphi 0, %s70
    %s88 = sphi 0, %s88
    %s90 = sphi 0, %s88
    %s91 = sphi 0, %s90
    %s105 = sphi 0, %s91
    %s109 = sphi 0, %s109
    %s111 = sphi 0, %s109
    %s112 = sphi 0, %s111
    %s126 = sphi 0, %s112
    %s130 = sphi 0, %s130
    %s132 = sphi 0, %s130
    %s133 = sphi 0, %s132
    %s147 = sphi 0, %s133
    %s153 = sphi 0, %s155
    %s156 = sphi 0, %s153
    %s157 = sphi 0, %s156
    %s173 = sphi 0, %s157
  $region4: #{cab_forward.1} parent=0 // loop_header_branch
    %15 = sbr.rel (%p13) target = $region8
  $region5: #{cab_forward.1} parent=0 // loop_body
    %s17 = ssub.s32 %s12, 1
    %s18 = ssub.s32 %s12, 2
    %s19 = sadd.s32 %s12, 1
    %s20 = ssub.s32 %s12, %s19
    %p21 = scmp.eq.s32.totalorder %s20, 0
    %s23 = sadd.s32 %s22, 1
    %s24 = scalar_select %p21, %s22, %s23
    %p27 = pneg %p21
    %p28 = scmp.eq.s32.totalorder %s12, 1
    %p29 = por %p27, %p28
    %p30 = scmp.ne.s32.totalorder %s22, %s25
    %p31 = scmp.eq.s32.totalorder %s12, 0
    %p32 = por %p30, %p31
    %p33 = scmp.ne.s32.totalorder %s22, %s25
    %p34 = scmp.eq.s32.totalorder %s17, 1
    %p35 = por %p33, %p34
    %p36 = scmp.ne.s32.totalorder %s25, %s26
    %p37 = scmp.eq.s32.totalorder %s17, 0
    %p38 = por %p36, %p37
    %p39 = scmp.ne.s32.totalorder %s25, %s26
    %p40 = scmp.eq.s32.totalorder %s18, 1
    %p41 = por %p39, %p40
    %p43 = scmp.ne.s32.totalorder %s26, %s42
    %p44 = scmp.eq.s32.totalorder %s18, 0
    %p45 = por %p43, %p44
    %s47 = sadd.s32 %s46, 1
    %p50 = scmp.eq.s32.totalorder %s12, 1
    %p51 = scmp.ne.s32.totalorder %s46, %s48
    %p52 = scmp.eq.s32.totalorder %s12, 0
    %p53 = por %p51, %p52
    %p54 = scmp.ne.s32.totalorder %s46, %s48
    %p55 = scmp.eq.s32.totalorder %s17, 1
    %p56 = por %p54, %p55
    %p57 = scmp.ne.s32.totalorder %s48, %s49
    %p58 = scmp.eq.s32.totalorder %s17, 0
    %p59 = por %p57, %p58
    %p60 = scmp.ne.s32.totalorder %s48, %s49
    %p61 = scmp.eq.s32.totalorder %s18, 1
    %p62 = por %p60, %p61
    %p64 = scmp.ne.s32.totalorder %s49, %s63
    %p65 = scmp.eq.s32.totalorder %s18, 0
    %p66 = por %p64, %p65
    %s68 = sadd.s32 %s67, 1
    %p71 = scmp.eq.s32.totalorder %s12, 1
    %p72 = scmp.ne.s32.totalorder %s67, %s69
    %p73 = scmp.eq.s32.totalorder %s12, 0
    %p74 = por %p72, %p73
    %p75 = scmp.ne.s32.totalorder %s67, %s69
    %p76 = scmp.eq.s32.totalorder %s17, 1
    %p77 = por %p75, %p76
    %p78 = scmp.ne.s32.totalorder %s69, %s70
    %p79 = scmp.eq.s32.totalorder %s17, 0
    %p80 = por %p78, %p79
    %p81 = scmp.ne.s32.totalorder %s69, %s70
    %p82 = scmp.eq.s32.totalorder %s18, 1
    %p83 = por %p81, %p82
    %p85 = scmp.ne.s32.totalorder %s70, %s84
    %p86 = scmp.eq.s32.totalorder %s18, 0
    %p87 = por %p85, %p86
    %s89 = sadd.s32 %s88, 1
    %p92 = scmp.eq.s32.totalorder %s12, 1
    %p93 = scmp.ne.s32.totalorder %s88, %s90
    %p94 = scmp.eq.s32.totalorder %s12, 0
    %p95 = por %p93, %p94
    %p96 = scmp.ne.s32.totalorder %s88, %s90
    %p97 = scmp.eq.s32.totalorder %s17, 1
    %p98 = por %p96, %p97
    %p99 = scmp.ne.s32.totalorder %s90, %s91
    %p100 = scmp.eq.s32.totalorder %s17, 0
    %p101 = por %p99, %p100
    %p102 = scmp.ne.s32.totalorder %s90, %s91
    %p103 = scmp.eq.s32.totalorder %s18, 1
    %p104 = por %p102, %p103
    %p106 = scmp.ne.s32.totalorder %s91, %s105
    %p107 = scmp.eq.s32.totalorder %s18, 0
    %p108 = por %p106, %p107
    %s110 = sadd.s32 %s109, 1
    %p113 = scmp.eq.s32.totalorder %s12, 1
    %p114 = scmp.ne.s32.totalorder %s109, %s111
    %p115 = scmp.eq.s32.totalorder %s12, 0
    %p116 = por %p114, %p115
    %p117 = scmp.ne.s32.totalorder %s109, %s111
    %p118 = scmp.eq.s32.totalorder %s17, 1
    %p119 = por %p117, %p118
    %p120 = scmp.ne.s32.totalorder %s111, %s112
    %p121 = scmp.eq.s32.totalorder %s17, 0
    %p122 = por %p120, %p121
    %p123 = scmp.ne.s32.totalorder %s111, %s112
    %p124 = scmp.eq.s32.totalorder %s18, 1
    %p125 = por %p123, %p124
    %p127 = scmp.ne.s32.totalorder %s112, %s126
    %p128 = scmp.eq.s32.totalorder %s18, 0
    %p129 = por %p127, %p128
    %s131 = sadd.s32 %s130, 1
    %p134 = scmp.eq.s32.totalorder %s12, 1
    %p135 = scmp.ne.s32.totalorder %s130, %s132
    %p136 = scmp.eq.s32.totalorder %s12, 0
    %p137 = por %p135, %p136
    %p138 = scmp.ne.s32.totalorder %s130, %s132
    %p139 = scmp.eq.s32.totalorder %s17, 1
    %p140 = por %p138, %p139
    %p141 = scmp.ne.s32.totalorder %s132, %s133
    %p142 = scmp.eq.s32.totalorder %s17, 0
    %p143 = por %p141, %p142
    %p144 = scmp.ne.s32.totalorder %s132, %s133
    %p145 = scmp.eq.s32.totalorder %s18, 1
    %p146 = por %p144, %p145
    %p148 = scmp.ne.s32.totalorder %s133, %s147
    %p149 = scmp.eq.s32.totalorder %s18, 0
    %p150 = por %p148, %p149
    %s151 = ssub.s32 %s12, %s19
    %p152 = scmp.eq.s32.totalorder %s151, 0
    %s154 = sadd.s32 %s153, 1
    %s155 = scalar_select %p152, %s153, %s154
    %p158 = pneg %p152
    %p159 = scmp.eq.s32.totalorder %s12, 1
    %p160 = por %p158, %p159
    %p161 = scmp.ne.s32.totalorder %s153, %s156
    %p162 = scmp.eq.s32.totalorder %s12, 0
    %p163 = por %p161, %p162
    %p164 = scmp.ne.s32.totalorder %s153, %s156
    %p165 = scmp.eq.s32.totalorder %s17, 1
    %p166 = por %p164, %p165
    %p167 = scmp.ne.s32.totalorder %s156, %s157
    %p168 = scmp.eq.s32.totalorder %s17, 0
    %p169 = por %p167, %p168
    %p170 = scmp.ne.s32.totalorder %s156, %s157
    %p171 = scmp.eq.s32.totalorder %s18, 1
    %p172 = por %p170, %p171
    %p174 = scmp.ne.s32.totalorder %s157, %s173
    %p175 = scmp.eq.s32.totalorder %s18, 0
    %p176 = por %p174, %p175
    %p177 = scmp.le.s32.totalorder 1, %s12
    %p178 = scmp.lt.s32.totalorder %s12, 3
    %p179 = pnand %p177, %p178
    %p180 = pneg %p179
    // Predicated region
    $region9: #{cab_forward.1} parent=5 // pred_check
      _
    $region10: #{cab_forward.1} parent=5 // pred_check_branch
      %182 = sbr.rel (%p179) target = $region12
    $region11: #{cab_forward.1} parent=5 // pred_region
      %s183 = ssub.s32 %s12, 1
      // Predicated region
      $region13: #{cab_forward.1} parent=11 // pred_check
        %p184 = pneg %p59
      $region14: #{cab_forward.1} parent=11 // pred_check_branch
        %186 = sbr.rel (%p184) target = $region16
      $region15: #{cab_forward.1} parent=11 // pred_region
        _
      $region16: #{cab_forward.1} parent=11 // pred_fallthru
        _
      // Predicated region
      $region17: #{cab_forward.1} parent=11 // pred_check
        %p187 = pneg %p80
      $region18: #{cab_forward.1} parent=11 // pred_check_branch
        %189 = sbr.rel (%p187) target = $region20
      $region19: #{cab_forward.1} parent=11 // pred_region
        _
      $region20: #{cab_forward.1} parent=11 // pred_fallthru
        _
      // Predicated region
      $region21: #{cab_forward.1} parent=11 // pred_check
        %p190 = pneg %p101
      $region22: #{cab_forward.1} parent=11 // pred_check_branch
        %192 = sbr.rel (%p190) target = $region24
      $region23: #{cab_forward.1} parent=11 // pred_region
        _
      $region24: #{cab_forward.1} parent=11 // pred_fallthru
        _
      // Predicated region
      $region25: #{cab_forward.1} parent=11 // pred_check
        %p193 = pneg %p122
      $region26: #{cab_forward.1} parent=11 // pred_check_branch
        %195 = sbr.rel (%p193) target = $region28
      $region27: #{cab_forward.1} parent=11 // pred_region
        _
      $region28: #{cab_forward.1} parent=11 // pred_fallthru
        _
      // Predicated region
      $region29: #{cab_forward.1} parent=11 // pred_check
        %p196 = pneg %p143
      $region30: #{cab_forward.1} parent=11 // pred_check_branch
        %198 = sbr.rel (%p196) target = $region32
      $region31: #{cab_forward.1} parent=11 // pred_region
        _
      $region32: #{cab_forward.1} parent=11 // pred_fallthru
        _
    $region12: #{cab_forward.1} parent=5 // pred_fallthru
      _
    %p199 = scmp.lt.s32.totalorder %s12, 2
    // Predicated region
    $region33: #{cab_forward.1} parent=5 // pred_check
      %p200 = pneg %p199
    $region34: #{cab_forward.1} parent=5 // pred_check_branch
      %202 = sbr.rel (%p200) target = $region36
    $region35: #{cab_forward.1} parent=5 // pred_region
      // Predicated region
      $region37: #{cab_forward.1} parent=35 // pred_check
        %p203 = pneg %p32
      $region38: #{cab_forward.1} parent=35 // pred_check_branch
        %205 = sbr.rel (%p203) target = $region40
      $region39: #{cab_forward.1} parent=35 // pred_region
        %p206 = scmp.lt.s32.totalorder %s12, 1
        %s207 = scalar_select %p206, %s12, 1
        %s208 = smul.addr %s207, 8
        %s209 = smul.addr %s208, 8
        %s210 = scalar_lea.vmem %s0, %s209
      $region40: #{cab_forward.1} parent=35 // pred_fallthru
        _
    $region36: #{cab_forward.1} parent=5 // pred_fallthru
      _
    %p211 = scmp.le.s32.totalorder 1, %s12
    %p212 = scmp.lt.s32.totalorder %s12, 3
    %p213 = pnand %p211, %p212
    %p214 = pneg %p213
    // Predicated region
    $region41: #{cab_forward.1} parent=5 // pred_check
      _
    $region42: #{cab_forward.1} parent=5 // pred_check_branch
      %216 = sbr.rel (%p213) target = $region44
    $region43: #{cab_forward.1} parent=5 // pred_region
      %s217 = ssub.s32 %s12, 1
      %p218 = scmp.lt.s32.totalorder %s17, 1
      %s219 = scalar_select %p218, %s17, 1
      %s220 = smul.addr %s219, 8
      %s221 = smul.addr %s220, 8
      %s222 = scalar_lea.vmem %s0, %s221
      %p223 = pneg %p38
      %p224 = pneg %p35
      %p225 = pneg %p59
      %p226 = pneg %p56
      %p227 = pneg %p80
      %p228 = pneg %p77
      %p229 = pneg %p101
      %p230 = pneg %p98
      %p231 = pneg %p122
      %p232 = pneg %p119
      %p233 = pneg %p143
      %p234 = pneg %p140
      %p235 = pneg %p169
      %p236 = pneg %p166
      %p237 = scmp.lt.s32.totalorder %s17, 1
      %s238 = scalar_select %p237, %s17, 1
      %s239 = smul.addr %s238, 8
      %s240 = smul.addr %s239, 8
      %s241 = scalar_lea.vmem %s6, %s240
      %p242 = scmp.lt.s32.totalorder %s17, 1
      %s243 = scalar_select %p242, %s17, 1
      %s244 = smul.addr %s243, 8
      %s245 = smul.addr %s244, 8
      %s246 = scalar_lea.vmem %s0, %s245
      %p247 = scmp.lt.s32.totalorder %s17, 1
      %s248 = scalar_select %p247, %s17, 1
      %s249 = smul.addr %s248, 8
      %s250 = smul.addr %s249, 8
      %s251 = scalar_lea.vmem %s6, %s250
      %v255 = vld [vmem:[%s1] sm:$0x3]
      %vm256 = vcmp.gt.s32.totalorder %v255, 0
      %vm257 = vcmp.lt.s32.totalorder %v255, 15
      %v258 = vld [vmem:[%s246] sm:$0xff]
      %v259 = vld [vmem:[%s246 + $0x8] sm:$0xff]
      %v260 = vld [vmem:[%s246 + $0x10] sm:$0xff]
      %v261 = vld [vmem:[%s246 + $0x18] sm:$0xff]
      %v262 = vld [vmem:[%s246 + $0x20] sm:$0xff]
      %v263 = vld [vmem:[%s246 + $0x28] sm:$0xff]
      %v264 = vld [vmem:[%s246 + $0x30] sm:$0xff]
      %v265 = vld [vmem:[%s246 + $0x38] sm:$0xff]
      %v266 = vpack.c.bf16 %v260, %v258
      %v267 = vpack.c.bf16 %v261, %v259
      %v268 = vpack.c.bf16 %v264, %v262
      %v269 = vpack.c.bf16 %v265, %v263
      %274 = vrot.lane.b32.xlu0 %v266, 17
      %v275 = vpop.permute.xlu0 %274
      %276 = vrot.lane.b32.xlu0 %v267, 17
      %v277 = vpop.permute.xlu0 %276
      %278 = vrot.lane.b32.xlu0 %v268, 17
      %v279 = vpop.permute.xlu0 %278
      %280 = vrot.lane.b32.xlu0 %v269, 17
      %v281 = vpop.permute.xlu0 %280
      %vm282 = vcmask 138240
      %v283 = vsel %vm282, %v275, %v277
      %v284 = vsel %vm282, %v279, %v281
      %vm287 = vcmask 138240
      %v290 = vsel %vm287, 0, %v275
      %v293 = vsel %vm287, 0, %v279
      %v296 = vsel %vm287, %v277, 0
      %v299 = vsel %vm287, %v281, 0
      %v301 = vsel %vm256, 1, 0
      %v302 = vlaneseq
      %v303 = vshrl.u32 %v302, 7
      %v304 = vsub.s32 0, %v303
      %v305 = vrot.slane %v301, %v304
      %v306 = vlaneseq
      %v307 = vshrl.u32 %v306, 7
      %v308 = vsub.s32 1, %v307
      %v309 = vrot.slane %v301, %v308
      %vm310 = vcmp.eq.s32.totalorder %v305, 1
      %vm311 = vcmp.eq.s32.totalorder %v309, 1
      %vm312 = vmpackc.low %vm311, %vm310
      %v313 = vsel %vm312, 65537, 0
      %v314 = vlaneseq
      %v315 = vshrl.u32 %v314, 7
      %v316 = vsub.s32 0, %v315
      %v317 = vrot.slane %v313, %v316
      %v318 = vlaneseq
      %v319 = vshrl.u32 %v318, 7
      %v320 = vsub.s32 4, %v319
      %v321 = vrot.slane %v313, %v320
      %vm322 = vcmp.ne.s16.totalorder %v317, 0
      %vm323 = vcmp.ne.s16.totalorder %v321, 0
      %v324 = vsel %vm322, %v290, 0
      %v325 = vsel %vm323, %v283, 0
      %v326 = vsel %vm322, %v293, 0
      %v327 = vsel %vm323, %v284, 0
      %328 = vst [vmem:[#allocation2] sm:$0xff] %v324
      %329 = vst [vmem:[#allocation2 + $0x8] sm:$0xff] %v325
      %330 = vst [vmem:[#allocation2 + $0x10] sm:$0xff] %v326
      %331 = vst [vmem:[#allocation2 + $0x18] sm:$0xff] %v327
      %336 = vrot.lane.b32.xlu0 %v290, 127
      %v337 = vpop.permute.xlu0 %336
      %338 = vrot.lane.b32.xlu0 %v283, 127
      %v339 = vpop.permute.xlu0 %338
      %340 = vrot.lane.b32.xlu0 %v296, 127
      %v341 = vpop.permute.xlu0 %340
      %342 = vrot.lane.b32.xlu0 %v293, 127
      %v343 = vpop.permute.xlu0 %342
      %344 = vrot.lane.b32.xlu0 %v284, 127
      %v345 = vpop.permute.xlu0 %344
      %346 = vrot.lane.b32.xlu0 %v299, 127
      %v347 = vpop.permute.xlu0 %346
      %vm348 = vcmask 1039360
      %v349 = vsel %vm348, %v337, %v339
      %v350 = vsel %vm348, %v339, %v341
      %v351 = vsel %vm348, %v343, %v345
      %v352 = vsel %vm348, %v345, %v347
      %357 = vst [vmem:[#allocation2 + $0x20] sm:$0xff] %v349
      %358 = vst [vmem:[#allocation2 + $0x28] sm:$0xff] %v350
      %359 = vst [vmem:[#allocation2 + $0x30] sm:$0xff] %v351
      %360 = vst [vmem:[#allocation2 + $0x38] sm:$0xff] %v352
      %v361 = vsel %vm257, 1, 0
      %v362 = vlaneseq
      %v363 = vshrl.u32 %v362, 7
      %v364 = vsub.s32 0, %v363
      %v365 = vrot.slane %v361, %v364
      %v366 = vlaneseq
      %v367 = vshrl.u32 %v366, 7
      %v368 = vsub.s32 1, %v367
      %v369 = vrot.slane %v361, %v368
      %vm370 = vcmp.eq.s32.totalorder %v365, 1
      %vm371 = vcmp.eq.s32.totalorder %v369, 1
      %vm372 = vmpackc.low %vm371, %vm370
      %v373 = vsel %vm372, 65537, 0
      %v374 = vlaneseq
      %v375 = vshrl.u32 %v374, 7
      %v376 = vsub.s32 0, %v375
      %v377 = vrot.slane %v373, %v376
      %v378 = vlaneseq
      %v379 = vshrl.u32 %v378, 7
      %v380 = vsub.s32 4, %v379
      %v381 = vrot.slane %v373, %v380
      %382 = vrot.lane.b32.xlu0 %v377, 2
      %v383 = vpop.permute.xlu0 %382
      %384 = vrot.lane.b32.xlu0 %v381, 2
      %v385 = vpop.permute.xlu0 %384
      %vm386 = vcmask 15360
      %v387 = vsel %vm386, %v383, %v385
      %vm388 = vcmp.ne.s16.totalorder %v383, 0
      %vm389 = vcmp.ne.s16.totalorder %v387, 0
      %vm390 = vcmp.ne.s16.totalorder %v385, 0
      %v391 = vsel %vm388, %v290, 0
      %v392 = vsel %vm389, %v283, 0
      %v393 = vsel %vm390, %v296, 0
      %v394 = vsel %vm388, %v293, 0
      %v395 = vsel %vm389, %v284, 0
      %v396 = vsel %vm390, %v299, 0
      %403 = vrot.lane.b32.xlu0 %v391, 126
      %v404 = vpop.permute.xlu0 %403
      %405 = vrot.lane.b32.xlu0 %v392, 126
      %v406 = vpop.permute.xlu0 %405
      %407 = vrot.lane.b32.xlu0 %v393, 126
      %v408 = vpop.permute.xlu0 %407
      %409 = vrot.lane.b32.xlu0 %v394, 126
      %v410 = vpop.permute.xlu0 %409
      %411 = vrot.lane.b32.xlu0 %v395, 126
      %v412 = vpop.permute.xlu0 %411
      %413 = vrot.lane.b32.xlu0 %v396, 126
      %v414 = vpop.permute.xlu0 %413
      %vm415 = vcmask 1031168
      %v416 = vsel %vm415, %v404, %v406
      %v417 = vsel %vm415, %v406, %v408
      %v418 = vsel %vm415, %v410, %v412
      %v419 = vsel %vm415, %v412, %v414
      %424 = vst [vmem:[#allocation2 + $0x40] sm:$0xff] %v416
      %425 = vst [vmem:[#allocation2 + $0x48] sm:$0xff] %v417
      %426 = vst [vmem:[#allocation2 + $0x50] sm:$0xff] %v418
      %427 = vst [vmem:[#allocation2 + $0x58] sm:$0xff] %v419
      %428 = vrot.lane.b32.xlu0 %v317, 16
      %v429 = vpop.permute.xlu0 %428
      %430 = vrot.lane.b32.xlu0 %v321, 16
      %v431 = vpop.permute.xlu0 %430
      %vm432 = vcmask 130048
      %v433 = vsel %vm432, %v429, %v431
      %vm434 = vcmp.ne.s16.totalorder %v429, 0
      %vm435 = vcmp.ne.s16.totalorder %v433, 0
      %vm436 = vcmp.ne.s16.totalorder %v431, 0
      %v437 = vsel %vm434, %v290, 0
      %v438 = vsel %vm435, %v283, 0
      %v439 = vsel %vm436, %v296, 0
      %v440 = vsel %vm434, %v293, 0
      %v441 = vsel %vm435, %v284, 0
      %v442 = vsel %vm436, %v299, 0
      %449 = vrot.lane.b32.xlu0 %v437, 112
      %v450 = vpop.permute.xlu0 %449
      %451 = vrot.lane.b32.xlu0 %v438, 112
      %v452 = vpop.permute.xlu0 %451
      %453 = vrot.lane.b32.xlu0 %v439, 112
      %v454 = vpop.permute.xlu0 %453
      %455 = vrot.lane.b32.xlu0 %v440, 112
      %v456 = vpop.permute.xlu0 %455
      %457 = vrot.lane.b32.xlu0 %v441, 112
      %v458 = vpop.permute.xlu0 %457
      %459 = vrot.lane.b32.xlu0 %v442, 112
      %v460 = vpop.permute.xlu0 %459
      %vm461 = vcmask 916480
      %v462 = vsel %vm461, %v450, %v452
      %v463 = vsel %vm461, %v452, %v454
      %v464 = vsel %vm461, %v456, %v458
      %v465 = vsel %vm461, %v458, %v460
      %470 = vst [vmem:[#allocation2 + $0x60] sm:$0xff] %v462
      %471 = vst [vmem:[#allocation2 + $0x68] sm:$0xff] %v463
      %472 = vst [vmem:[#allocation2 + $0x70] sm:$0xff] %v464
      %473 = vst [vmem:[#allocation2 + $0x78] sm:$0xff] %v465
      %474 = vrot.lane.b32.xlu0 %v290, 111
      %v475 = vpop.permute.xlu0 %474
      %476 = vrot.lane.b32.xlu0 %v283, 111
      %v477 = vpop.permute.xlu0 %476
      %478 = vrot.lane.b32.xlu0 %v296, 111
      %v479 = vpop.permute.xlu0 %478
      %480 = vrot.lane.b32.xlu0 %v293, 111
      %v481 = vpop.permute.xlu0 %480
      %482 = vrot.lane.b32.xlu0 %v284, 111
      %v483 = vpop.permute.xlu0 %482
      %484 = vrot.lane.b32.xlu0 %v299, 111
      %v485 = vpop.permute.xlu0 %484
      %vm486 = vcmask 908288
      %v487 = vsel %vm486, %v475, %v477
      %v488 = vsel %vm486, %v477, %v479
      %v489 = vsel %vm486, %v481, %v483
      %v490 = vsel %vm486, %v483, %v485
      %495 = vst [vmem:[#allocation2 + $0x80] sm:$0xff] %v487
      %496 = vst [vmem:[#allocation2 + $0x88] sm:$0xff] %v488
      %497 = vst [vmem:[#allocation2 + $0x90] sm:$0xff] %v489
      %498 = vst [vmem:[#allocation2 + $0x98] sm:$0xff] %v490
      %499 = vrot.lane.b32.xlu0 %v377, 18
      %v500 = vpop.permute.xlu0 %499
      %501 = vrot.lane.b32.xlu0 %v381, 18
      %v502 = vpop.permute.xlu0 %501
      %vm503 = vcmask 146432
      %v504 = vsel %vm503, %v500, %v502
      %vm505 = vcmp.ne.s16.totalorder %v500, 0
      %vm506 = vcmp.ne.s16.totalorder %v504, 0
      %vm507 = vcmp.ne.s16.totalorder %v502, 0
      %v508 = vsel %vm505, %v290, 0
      %v509 = vsel %vm506, %v283, 0
      %v510 = vsel %vm507, %v296, 0
      %v511 = vsel %vm505, %v293, 0
      %v512 = vsel %vm506, %v284, 0
      %v513 = vsel %vm507, %v299, 0
      %520 = vrot.lane.b32.xlu0 %v508, 110
      %v521 = vpop.permute.xlu0 %520
      %522 = vrot.lane.b32.xlu0 %v509, 110
      %v523 = vpop.permute.xlu0 %522
      %524 = vrot.lane.b32.xlu0 %v510, 110
      %v525 = vpop.permute.xlu0 %524
      %526 = vrot.lane.b32.xlu0 %v511, 110
      %v527 = vpop.permute.xlu0 %526
      %528 = vrot.lane.b32.xlu0 %v512, 110
      %v529 = vpop.permute.xlu0 %528
      %530 = vrot.lane.b32.xlu0 %v513, 110
      %v531 = vpop.permute.xlu0 %530
      %vm532 = vcmask 900096
      %v533 = vsel %vm532, %v521, %v523
      %v534 = vsel %vm532, %v523, %v525
      %v535 = vsel %vm532, %v527, %v529
      %v536 = vsel %vm532, %v529, %v531
      %541 = vst [vmem:[#allocation2 + $0xa0] sm:$0xff] %v533
      %542 = vst [vmem:[#allocation2 + $0xa8] sm:$0xff] %v534
      %543 = vst [vmem:[#allocation2 + $0xb0] sm:$0xff] %v535
      %544 = vst [vmem:[#allocation2 + $0xb8] sm:$0xff] %v536
      %545 = vrot.lane.b32.xlu0 %v317, 32
      %v546 = vpop.permute.xlu0 %545
      %547 = vrot.lane.b32.xlu0 %v321, 32
      %v548 = vpop.permute.xlu0 %547
      %vm549 = vcmask 261120
      %v550 = vsel %vm549, %v546, %v548
      %vm551 = vcmp.ne.s16.totalorder %v546, 0
      %vm552 = vcmp.ne.s16.totalorder %v550, 0
      %vm553 = vcmp.ne.s16.totalorder %v548, 0
      %v554 = vsel %vm551, %v290, 0
      %v555 = vsel %vm552, %v283, 0
      %v556 = vsel %vm553, %v296, 0
      %v557 = vsel %vm551, %v293, 0
      %v558 = vsel %vm552, %v284, 0
      %v559 = vsel %vm553, %v299, 0
      %566 = vrot.lane.b32.xlu0 %v554, 96
      %v567 = vpop.permute.xlu0 %566
      %568 = vrot.lane.b32.xlu0 %v555, 96
      %v569 = vpop.permute.xlu0 %568
      %570 = vrot.lane.b32.xlu0 %v556, 96
      %v571 = vpop.permute.xlu0 %570
      %572 = vrot.lane.b32.xlu0 %v557, 96
      %v573 = vpop.permute.xlu0 %572
      %574 = vrot.lane.b32.xlu0 %v558, 96
      %v575 = vpop.permute.xlu0 %574
      %576 = vrot.lane.b32.xlu0 %v559, 96
      %v577 = vpop.permute.xlu0 %576
      %vm578 = vcmask 785408
      %v579 = vsel %vm578, %v567, %v569
      %v580 = vsel %vm578, %v569, %v571
      %v581 = vsel %vm578, %v573, %v575
      %v582 = vsel %vm578, %v575, %v577
      %587 = vst [vmem:[#allocation2 + $0xc0] sm:$0xff] %v579
      %588 = vst [vmem:[#allocation2 + $0xc8] sm:$0xff] %v580
      %589 = vst [vmem:[#allocation2 + $0xd0] sm:$0xff] %v581
      %590 = vst [vmem:[#allocation2 + $0xd8] sm:$0xff] %v582
      %591 = vrot.lane.b32.xlu0 %v290, 95
      %v592 = vpop.permute.xlu0 %591
      %593 = vrot.lane.b32.xlu0 %v283, 95
      %v594 = vpop.permute.xlu0 %593
      %595 = vrot.lane.b32.xlu0 %v296, 95
      %v596 = vpop.permute.xlu0 %595
      %597 = vrot.lane.b32.xlu0 %v293, 95
      %v598 = vpop.permute.xlu0 %597
      %599 = vrot.lane.b32.xlu0 %v284, 95
      %v600 = vpop.permute.xlu0 %599
      %601 = vrot.lane.b32.xlu0 %v299, 95
      %v602 = vpop.permute.xlu0 %601
      %vm603 = vcmask 777216
      %v604 = vsel %vm603, %v592, %v594
      %v605 = vsel %vm603, %v594, %v596
      %v606 = vsel %vm603, %v598, %v600
      %v607 = vsel %vm603, %v600, %v602
      %612 = vst [vmem:[#allocation2 + $0xe0] sm:$0xff] %v604
      %613 = vst [vmem:[#allocation2 + $0xe8] sm:$0xff] %v605
      %614 = vst [vmem:[#allocation2 + $0xf0] sm:$0xff] %v606
      %615 = vst [vmem:[#allocation2 + $0xf8] sm:$0xff] %v607
      %616 = vrot.lane.b32.xlu0 %v377, 34
      %v617 = vpop.permute.xlu0 %616
      %618 = vrot.lane.b32.xlu0 %v381, 34
      %v619 = vpop.permute.xlu0 %618
      %vm620 = vcmask 277504
      %v621 = vsel %vm620, %v617, %v619
      %vm622 = vcmp.ne.s16.totalorder %v617, 0
      %vm623 = vcmp.ne.s16.totalorder %v621, 0
      %vm624 = vcmp.ne.s16.totalorder %v619, 0
      %v625 = vsel %vm622, %v290, 0
      %v626 = vsel %vm623, %v283, 0
      %v627 = vsel %vm624, %v296, 0
      %v628 = vsel %vm622, %v293, 0
      %v629 = vsel %vm623, %v284, 0
      %v630 = vsel %vm624, %v299, 0
      %637 = vrot.lane.b32.xlu0 %v625, 94
      %v638 = vpop.permute.xlu0 %637
      %639 = vrot.lane.b32.xlu0 %v626, 94
      %v640 = vpop.permute.xlu0 %639
      %641 = vrot.lane.b32.xlu0 %v627, 94
      %v642 = vpop.permute.xlu0 %641
      %643 = vrot.lane.b32.xlu0 %v628, 94
      %v644 = vpop.permute.xlu0 %643
      %645 = vrot.lane.b32.xlu0 %v629, 94
      %v646 = vpop.permute.xlu0 %645
      %647 = vrot.lane.b32.xlu0 %v630, 94
      %v648 = vpop.permute.xlu0 %647
      %vm649 = vcmask 769024
      %v650 = vsel %vm649, %v638, %v640
      %v651 = vsel %vm649, %v640, %v642
      %v652 = vsel %vm649, %v644, %v646
      %v653 = vsel %vm649, %v646, %v648
      %658 = vst [vmem:[#allocation2 + $0x100] sm:$0xff] %v650
      %659 = vst [vmem:[#allocation2 + $0x108] sm:$0xff] %v651
      %660 = vst [vmem:[#allocation2 + $0x110] sm:$0xff] %v652
      %661 = vst [vmem:[#allocation2 + $0x118] sm:$0xff] %v653
      %v662 = vld [vmem:[%s2] sm:$0xff]
      %v663 = vld [vmem:[%s2 + $0x8] sm:$0xf]
      %v664 = vld [vmem:[%s2 + $0xc] sm:$0xff]
      %v665 = vld [vmem:[%s2 + $0x14] sm:$0xf]
      %v666 = vld [vmem:[%s2 + $0x18] sm:$0xff]
      %v667 = vld [vmem:[%s2 + $0x20] sm:$0xf]
      %v668 = vld [vmem:[%s2 + $0x24] sm:$0xff]
      %v669 = vld [vmem:[%s2 + $0x2c] sm:$0xf]
      %v670 = vld [vmem:[#allocation2] sm:$0xff]
      %v671 = vld [vmem:[#allocation2 + $0x8] sm:$0xff]
      %v672 = vld [vmem:[#allocation2 + $0x10] sm:$0xff]
      %v673 = vld [vmem:[#allocation2 + $0x18] sm:$0xff]
      %v674 = vld [vmem:[#allocation2 + $0x20] sm:$0xff]
      %v675 = vld [vmem:[#allocation2 + $0x28] sm:$0xff]
      %v676 = vld [vmem:[#allocation2 + $0x30] sm:$0xff]
      %v677 = vld [vmem:[#allocation2 + $0x38] sm:$0xff]
      %v678 = vld [vmem:[#allocation2 + $0x40] sm:$0xff]
      %v679 = vld [vmem:[#allocation2 + $0x48] sm:$0xff]
      %v680 = vld [vmem:[#allocation2 + $0x50] sm:$0xff]
      %v681 = vld [vmem:[#allocation2 + $0x58] sm:$0xff]
      %v682 = vld [vmem:[#allocation2 + $0x60] sm:$0xff]
      %v683 = vld [vmem:[#allocation2 + $0x68] sm:$0xff]
      %v684 = vld [vmem:[#allocation2 + $0x70] sm:$0xff]
      %v685 = vld [vmem:[#allocation2 + $0x78] sm:$0xff]
      %v686 = vld [vmem:[#allocation2 + $0x80] sm:$0xff]
      %v687 = vld [vmem:[#allocation2 + $0x88] sm:$0xff]
      %v688 = vld [vmem:[#allocation2 + $0x90] sm:$0xff]
      %v689 = vld [vmem:[#allocation2 + $0x98] sm:$0xff]
      %v690 = vld [vmem:[#allocation2 + $0xa0] sm:$0xff]
      %v691 = vld [vmem:[#allocation2 + $0xa8] sm:$0xff]
      %v692 = vld [vmem:[#allocation2 + $0xb0] sm:$0xff]
      %v693 = vld [vmem:[#allocation2 + $0xb8] sm:$0xff]
      %v694 = vld [vmem:[#allocation2 + $0xc0] sm:$0xff]
      %v695 = vld [vmem:[#allocation2 + $0xc8] sm:$0xff]
      %v696 = vld [vmem:[#allocation2 + $0xd0] sm:$0xff]
      %v697 = vld [vmem:[#allocation2 + $0xd8] sm:$0xff]
      %v698 = vld [vmem:[#allocation2 + $0xe0] sm:$0xff]
      %v699 = vld [vmem:[#allocation2 + $0xe8] sm:$0xff]
      %v700 = vld [vmem:[#allocation2 + $0xf0] sm:$0xff]
      %v701 = vld [vmem:[#allocation2 + $0xf8] sm:$0xff]
      %v702 = vld [vmem:[#allocation2 + $0x100] sm:$0xff]
      %v703 = vld [vmem:[#allocation2 + $0x108] sm:$0xff]
      %v704 = vld [vmem:[#allocation2 + $0x110] sm:$0xff]
      %v705 = vld [vmem:[#allocation2 + $0x118] sm:$0xff]
      %v714 = vunpack.c.l.b16 %v662
      %v715 = vunpack.c.h.b16 %v662
      %v716 = vunpack.c.l.b16 %v663
      %v717 = vunpack.c.l.b16 %v664
      %v718 = vunpack.c.h.b16 %v664
      %v719 = vunpack.c.l.b16 %v665
      %v720 = vunpack.c.l.b16 %v666
      %v721 = vunpack.c.h.b16 %v666
      %v722 = vunpack.c.l.b16 %v667
      %v723 = vunpack.c.l.b16 %v668
      %v724 = vunpack.c.h.b16 %v668
      %v725 = vunpack.c.l.b16 %v669
      %v726 = vpack.c.b16 %v717, %v714
      %v727 = vpack.c.b16 %v718, %v715
      %v728 = vpack.c.b16 %v719, %v716
      %v729 = vpack.c.b16 %v723, %v720
      %v730 = vpack.c.b16 %v724, %v721
      %v731 = vpack.c.b16 %v725, %v722
      %vm736 = vcmask 261120
      %v738 = vsel %vm736, %v728, 0
      %v741 = vsel %vm736, %v731, 0
      %743 = vmatprep.subr.bf16.mxu0 %v671
      %744 = vmatpush1.bf16.msra.mxu0 %v670
      %745 = vmatprep.subr.bf16.mxu0 %v673
      %746 = vmatpush1.bf16.msra.mxu0 %v672
      %747 = vmatprep.subr.bf16.mxu0 %v675
      %748 = vmatpush1.bf16.msra.mxu0 %v674
      %749 = vmatprep.subr.bf16.mxu0 %v677
      %750 = vmatpush1.bf16.msra.mxu0 %v676
      %751 = vmatprep.subr.bf16.mxu0 %v679
      %752 = vmatpush1.bf16.msra.mxu0 %v678
      %753 = vmatprep.subr.bf16.mxu0 %v681
      %754 = vmatpush1.bf16.msra.mxu0 %v680
      %755 = vmatprep.subr.bf16.mxu0 %v683
      %756 = vmatpush1.bf16.msra.mxu0 %v682
      %757 = vmatprep.subr.bf16.mxu0 %v685
      %758 = vmatpush1.bf16.msra.mxu0 %v684
      %759 = vmatprep.subr.bf16.mxu0 %v687
      %760 = vmatpush1.bf16.msra.mxu0 %v686
      %761 = vmatprep.subr.bf16.mxu0 %v689
      %762 = vmatpush1.bf16.msra.mxu0 %v688
      %763 = vmatprep.subr.bf16.mxu0 %v691
      %764 = vmatpush1.bf16.msra.mxu0 %v690
      %765 = vmatprep.subr.bf16.mxu0 %v693
      %766 = vmatpush1.bf16.msra.mxu0 %v692
      %767 = vmatprep.subr.bf16.mxu0 %v695
      %768 = vmatpush1.bf16.msra.mxu0 %v694
      %769 = vmatprep.subr.bf16.mxu0 %v697
      %770 = vmatpush1.bf16.msra.mxu0 %v696
      %771 = vmatprep.subr.bf16.mxu0 %v699
      %772 = vmatpush1.bf16.msra.mxu0 %v698
      %773 = vmatprep.subr.bf16.mxu0 %v701
      %774 = vmatpush1.bf16.msra.mxu0 %v700
      %775 = vmatprep.mubr.bf16.mxu0 %v727
      %776 = vmatmul.mubr.bf16.gmra.mrb[0].mxu0 %v726
      %v777 = vpop.f32.mrb[0].mxu0
      %v778 = vadd.f32 0.0, %v777
      %v779 = vpop.f32.mrb[0].mxu0
      %v780 = vadd.f32 0.0, %v779
      %v781 = vpop.f32.mrb[0].mxu0
      %v782 = vadd.f32 0.0, %v781
      %v783 = vpop.f32.mrb[0].mxu0
      %v784 = vadd.f32 0.0, %v783
      %785 = vmatprep.mubr.bf16.mxu0 %v730
      %786 = vmatmul.mubr.bf16.gmra.mrb[0].mxu0 %v729
      %v787 = vpop.f32.mrb[0].mxu0
      %v788 = vadd.f32 0.0, %v787
      %v789 = vpop.f32.mrb[0].mxu0
      %v790 = vadd.f32 0.0, %v789
      %v791 = vpop.f32.mrb[0].mxu0
      %v792 = vadd.f32 0.0, %v791
      %v793 = vpop.f32.mrb[0].mxu0
      %v794 = vadd.f32 0.0, %v793
      %795 = vdwg.mxu0
      %796 = vmatprep.subr.bf16.mxu0 %v703
      %797 = vmatpush1.bf16.msra.mxu0 %v702
      %798 = vmatprep.subr.bf16.mxu0 %v705
      %799 = vmatpush1.bf16.msra.mxu0 %v704
      %800 = vmatprep.subr.bf16.mxu0 0
      %801 = vmatpush1.bf16.msra.mxu0 0
      %802 = vmatprep.subr.bf16.mxu0 0
      %803 = vmatpush1.bf16.msra.mxu0 0
      %804 = vmatprep.subr.bf16.mxu0 0
      %805 = vmatpush1.bf16.msra.mxu0 0
      %806 = vmatprep.subr.bf16.mxu0 0
      %807 = vmatpush1.bf16.msra.mxu0 0
      %808 = vmatprep.subr.bf16.mxu0 0
      %809 = vmatpush1.bf16.msra.mxu0 0
      %810 = vmatprep.subr.bf16.mxu0 0
      %811 = vmatpush1.bf16.msra.mxu0 0
      %812 = vmatprep.subr.bf16.mxu0 0
      %813 = vmatpush1.bf16.msra.mxu0 0
      %814 = vmatprep.subr.bf16.mxu0 0
      %815 = vmatpush1.bf16.msra.mxu0 0
      %816 = vmatprep.subr.bf16.mxu0 0
      %817 = vmatpush1.bf16.msra.mxu0 0
      %818 = vmatprep.subr.bf16.mxu0 0
      %819 = vmatpush1.bf16.msra.mxu0 0
      %820 = vmatprep.subr.bf16.mxu0 0
      %821 = vmatpush1.bf16.msra.mxu0 0
      %822 = vmatprep.subr.bf16.mxu0 0
      %823 = vmatpush1.bf16.msra.mxu0 0
      %824 = vmatprep.subr.bf16.mxu0 0
      %825 = vmatpush1.bf16.msra.mxu0 0
      %826 = vmatprep.subr.bf16.mxu0 0
      %827 = vmatpush1.bf16.msra.mxu0 0
      %828 = vmatprep.mubr.bf16.mxu0 0
      %829 = vmatmul.mubr.bf16.gmra.mrb[0].mxu0 %v738
      %v830 = vpop.f32.mrb[0].mxu0
      %v831 = vadd.f32 %v778, %v830
      %v832 = vpop.f32.mrb[0].mxu0
      %v833 = vadd.f32 %v780, %v832
      %v834 = vpop.f32.mrb[0].mxu0
      %v835 = vadd.f32 %v782, %v834
      %v836 = vpop.f32.mrb[0].mxu0
      %v837 = vadd.f32 %v784, %v836
      %838 = vmatprep.mubr.bf16.mxu0 0
      %839 = vmatmul.mubr.bf16.gmra.mrb[0].mxu0 %v741
      %v840 = vpop.f32.mrb[0].mxu0
      %v841 = vadd.f32 %v788, %v840
      %v842 = vpop.f32.mrb[0].mxu0
      %v843 = vadd.f32 %v790, %v842
      %v844 = vpop.f32.mrb[0].mxu0
      %v845 = vadd.f32 %v792, %v844
      %v846 = vpop.f32.mrb[0].mxu0
      %v847 = vadd.f32 %v794, %v846
      %848 = vdwg.mxu0
      %v849 = vmax.f32 %v831, 0.0
      %v850 = vmax.f32 %v833, 0.0
      %v851 = vmax.f32 %v835, 0.0
      %v852 = vmax.f32 %v837, 0.0
      %v853 = vmax.f32 %v841, 0.0
      %v854 = vmax.f32 %v843, 0.0
      %v855 = vmax.f32 %v845, 0.0
      %v856 = vmax.f32 %v847, 0.0
      %v857 = vpack.c.bf16 %v851, %v849
      %v858 = vpack.c.bf16 %v852, %v850
      %v859 = vpack.c.bf16 %v855, %v853
      %v860 = vpack.c.bf16 %v856, %v854
      %865 = vrot.lane.b32.xlu0 %v857, 17
      %v866 = vpop.permute.xlu0 %865
      %867 = vrot.lane.b32.xlu0 %v858, 17
      %v868 = vpop.permute.xlu0 %867
      %869 = vrot.lane.b32.xlu0 %v859, 17
      %v870 = vpop.permute.xlu0 %869
      %871 = vrot.lane.b32.xlu0 %v860, 17
      %v872 = vpop.permute.xlu0 %871
      %v873 = vsel %vm282, %v866, %v868
      %v874 = vsel %vm282, %v870, %v872
      %v878 = vsel %vm287, 0, %v866
      %v881 = vsel %vm287, 0, %v870
      %v884 = vsel %vm287, %v868, 0
      %v887 = vsel %vm287, %v872, 0
      %v889 = vsel %vm322, %v878, 0
      %v890 = vsel %vm323, %v873, 0
      %v891 = vsel %vm322, %v881, 0
      %v892 = vsel %vm323, %v874, 0
      %893 = vst [vmem:[#allocation2] sm:$0xff] %v889
      %894 = vst [vmem:[#allocation2 + $0x8] sm:$0xff] %v890
      %895 = vst [vmem:[#allocation2 + $0x10] sm:$0xff] %v891
      %896 = vst [vmem:[#allocation2 + $0x18] sm:$0xff] %v892
      %901 = vrot.lane.b32.xlu0 %v878, 127
      %v902 = vpop.permute.xlu0 %901
      %903 = vrot.lane.b32.xlu0 %v873, 127
      %v904 = vpop.permute.xlu0 %903
      %905 = vrot.lane.b32.xlu0 %v884, 127
      %v906 = vpop.permute.xlu0 %905
      %907 = vrot.lane.b32.xlu0 %v881, 127
      %v908 = vpop.permute.xlu0 %907
      %909 = vrot.lane.b32.xlu0 %v874, 127
      %v910 = vpop.permute.xlu0 %909
      %911 = vrot.lane.b32.xlu0 %v887, 127
      %v912 = vpop.permute.xlu0 %911
      %v913 = vsel %vm348, %v902, %v904
      %v914 = vsel %vm348, %v904, %v906
      %v915 = vsel %vm348, %v908, %v910
      %v916 = vsel %vm348, %v910, %v912
      %921 = vst [vmem:[#allocation2 + $0x20] sm:$0xff] %v913
      %922 = vst [vmem:[#allocation2 + $0x28] sm:$0xff] %v914
      %923 = vst [vmem:[#allocation2 + $0x30] sm:$0xff] %v915
      %924 = vst [vmem:[#allocation2 + $0x38] sm:$0xff] %v916
      %v925 = vsel %vm388, %v878, 0
      %v926 = vsel %vm389, %v873, 0
      %v927 = vsel %vm390, %v884, 0
      %v928 = vsel %vm388, %v881, 0
      %v929 = vsel %vm389, %v874, 0
      %v930 = vsel %vm390, %v887, 0
      %937 = vrot.lane.b32.xlu0 %v925, 126
      %v938 = vpop.permute.xlu0 %937
      %939 = vrot.lane.b32.xlu0 %v926, 126
      %v940 = vpop.permute.xlu0 %939
      %941 = vrot.lane.b32.xlu0 %v927, 126
      %v942 = vpop.permute.xlu0 %941
      %943 = vrot.lane.b32.xlu0 %v928, 126
      %v944 = vpop.permute.xlu0 %943
      %945 = vrot.lane.b32.xlu0 %v929, 126
      %v946 = vpop.permute.xlu0 %945
      %947 = vrot.lane.b32.xlu0 %v930, 126
      %v948 = vpop.permute.xlu0 %947
      %v949 = vsel %vm415, %v938, %v940
      %v950 = vsel %vm415, %v940, %v942
      %v951 = vsel %vm415, %v944, %v946
      %v952 = vsel %vm415, %v946, %v948
      %957 = vst [vmem:[#allocation2 + $0x40] sm:$0xff] %v949
      %958 = vst [vmem:[#allocation2 + $0x48] sm:$0xff] %v950
      %959 = vst [vmem:[#allocation2 + $0x50] sm:$0xff] %v951
      %960 = vst [vmem:[#allocation2 + $0x58] sm:$0xff] %v952
      %v961 = vsel %vm434, %v878, 0
      %v962 = vsel %vm435, %v873, 0
      %v963 = vsel %vm436, %v884, 0
      %v964 = vsel %vm434, %v881, 0
      %v965 = vsel %vm435, %v874, 0
      %v966 = vsel %vm436, %v887, 0
      %973 = vrot.lane.b32.xlu0 %v961, 112
      %v974 = vpop.permute.xlu0 %973
      %975 = vrot.lane.b32.xlu0 %v962, 112
      %v976 = vpop.permute.xlu0 %975
      %977 = vrot.lane.b32.xlu0 %v963, 112
      %v978 = vpop.permute.xlu0 %977
      %979 = vrot.lane.b32.xlu0 %v964, 112
      %v980 = vpop.permute.xlu0 %979
      %981 = vrot.lane.b32.xlu0 %v965, 112
      %v982 = vpop.permute.xlu0 %981
      %983 = vrot.lane.b32.xlu0 %v966, 112
      %v984 = vpop.permute.xlu0 %983
      %v985 = vsel %vm461, %v974, %v976
      %v986 = vsel %vm461, %v976, %v978
      %v987 = vsel %vm461, %v980, %v982
      %v988 = vsel %vm461, %v982, %v984
      %993 = vst [vmem:[#allocation2 + $0x60] sm:$0xff] %v985
      %994 = vst [vmem:[#allocation2 + $0x68] sm:$0xff] %v986
      %995 = vst [vmem:[#allocation2 + $0x70] sm:$0xff] %v987
      %996 = vst [vmem:[#allocation2 + $0x78] sm:$0xff] %v988
      %997 = vrot.lane.b32.xlu0 %v878, 111
      %v998 = vpop.permute.xlu0 %997
      %999 = vrot.lane.b32.xlu0 %v873, 111
      %v1000 = vpop.permute.xlu0 %999
      %1001 = vrot.lane.b32.xlu0 %v884, 111
      %v1002 = vpop.permute.xlu0 %1001
      %1003 = vrot.lane.b32.xlu0 %v881, 111
      %v1004 = vpop.permute.xlu0 %1003
      %1005 = vrot.lane.b32.xlu0 %v874, 111
      %v1006 = vpop.permute.xlu0 %1005
      %1007 = vrot.lane.b32.xlu0 %v887, 111
      %v1008 = vpop.permute.xlu0 %1007
      %v1009 = vsel %vm486, %v998, %v1000
      %v1010 = vsel %vm486, %v1000, %v1002
      %v1011 = vsel %vm486, %v1004, %v1006
      %v1012 = vsel %vm486, %v1006, %v1008
      %1017 = vst [vmem:[#allocation2 + $0x80] sm:$0xff] %v1009
      %1018 = vst [vmem:[#allocation2 + $0x88] sm:$0xff] %v1010
      %1019 = vst [vmem:[#allocation2 + $0x90] sm:$0xff] %v1011
      %1020 = vst [vmem:[#allocation2 + $0x98] sm:$0xff] %v1012
      %v1021 = vsel %vm505, %v878, 0
      %v1022 = vsel %vm506, %v873, 0
      %v1023 = vsel %vm507, %v884, 0
      %v1024 = vsel %vm505, %v881, 0
      %v1025 = vsel %vm506, %v874, 0
      %v1026 = vsel %vm507, %v887, 0
      %1033 = vrot.lane.b32.xlu0 %v1021, 110
      %v1034 = vpop.permute.xlu0 %1033
      %1035 = vrot.lane.b32.xlu0 %v1022, 110
      %v1036 = vpop.permute.xlu0 %1035
      %1037 = vrot.lane.b32.xlu0 %v1023, 110
      %v1038 = vpop.permute.xlu0 %1037
      %1039 = vrot.lane.b32.xlu0 %v1024, 110
      %v1040 = vpop.permute.xlu0 %1039
      %1041 = vrot.lane.b32.xlu0 %v1025, 110
      %v1042 = vpop.permute.xlu0 %1041
      %1043 = vrot.lane.b32.xlu0 %v1026, 110
      %v1044 = vpop.permute.xlu0 %1043
      %v1045 = vsel %vm532, %v1034, %v1036
      %v1046 = vsel %vm532, %v1036, %v1038
      %v1047 = vsel %vm532, %v1040, %v1042
      %v1048 = vsel %vm532, %v1042, %v1044
      %1053 = vst [vmem:[#allocation2 + $0xa0] sm:$0xff] %v1045
      %1054 = vst [vmem:[#allocation2 + $0xa8] sm:$0xff] %v1046
      %1055 = vst [vmem:[#allocation2 + $0xb0] sm:$0xff] %v1047
      %1056 = vst [vmem:[#allocation2 + $0xb8] sm:$0xff] %v1048
      %v1057 = vsel %vm551, %v878, 0
      %v1058 = vsel %vm552, %v873, 0
      %v1059 = vsel %vm553, %v884, 0
      %v1060 = vsel %vm551, %v881, 0
      %v1061 = vsel %vm552, %v874, 0
      %v1062 = vsel %vm553, %v887, 0
      %1069 = vrot.lane.b32.xlu0 %v1057, 96
      %v1070 = vpop.permute.xlu0 %1069
      %1071 = vrot.lane.b32.xlu0 %v1058, 96
      %v1072 = vpop.permute.xlu0 %1071
      %1073 = vrot.lane.b32.xlu0 %v1059, 96
      %v1074 = vpop.permute.xlu0 %1073
      %1075 = vrot.lane.b32.xlu0 %v1060, 96
      %v1076 = vpop.permute.xlu0 %1075
      %1077 = vrot.lane.b32.xlu0 %v1061, 96
      %v1078 = vpop.permute.xlu0 %1077
      %1079 = vrot.lane.b32.xlu0 %v1062, 96
      %v1080 = vpop.permute.xlu0 %1079
      %v1081 = vsel %vm578, %v1070, %v1072
      %v1082 = vsel %vm578, %v1072, %v1074
      %v1083 = vsel %vm578, %v1076, %v1078
      %v1084 = vsel %vm578, %v1078, %v1080
      %1089 = vst [vmem:[#allocation2 + $0xc0] sm:$0xff] %v1081
      %1090 = vst [vmem:[#allocation2 + $0xc8] sm:$0xff] %v1082
      %1091 = vst [vmem:[#allocation2 + $0xd0] sm:$0xff] %v1083
      %1092 = vst [vmem:[#allocation2 + $0xd8] sm:$0xff] %v1084
      %1093 = vrot.lane.b32.xlu0 %v878, 95
      %v1094 = vpop.permute.xlu0 %1093
      %1095 = vrot.lane.b32.xlu0 %v873, 95
      %v1096 = vpop.permute.xlu0 %1095
      %1097 = vrot.lane.b32.xlu0 %v884, 95
      %v1098 = vpop.permute.xlu0 %1097
      %1099 = vrot.lane.b32.xlu0 %v881, 95
      %v1100 = vpop.permute.xlu0 %1099
      %1101 = vrot.lane.b32.xlu0 %v874, 95
      %v1102 = vpop.permute.xlu0 %1101
      %1103 = vrot.lane.b32.xlu0 %v887, 95
      %v1104 = vpop.permute.xlu0 %1103
      %v1105 = vsel %vm603, %v1094, %v1096
      %v1106 = vsel %vm603, %v1096, %v1098
      %v1107 = vsel %vm603, %v1100, %v1102
      %v1108 = vsel %vm603, %v1102, %v1104
      %1113 = vst [vmem:[#allocation2 + $0xe0] sm:$0xff] %v1105
      %1114 = vst [vmem:[#allocation2 + $0xe8] sm:$0xff] %v1106
      %1115 = vst [vmem:[#allocation2 + $0xf0] sm:$0xff] %v1107
      %1116 = vst [vmem:[#allocation2 + $0xf8] sm:$0xff] %v1108
      %v1117 = vsel %vm622, %v878, 0
      %v1118 = vsel %vm623, %v873, 0
      %v1119 = vsel %vm624, %v884, 0
      %v1120 = vsel %vm622, %v881, 0
      %v1121 = vsel %vm623, %v874, 0
      %v1122 = vsel %vm624, %v887, 0
      %1129 = vrot.lane.b32.xlu0 %v1117, 94
      %v1130 = vpop.permute.xlu0 %1129
      %1131 = vrot.lane.b32.xlu0 %v1118, 94
      %v1132 = vpop.permute.xlu0 %1131
      %1133 = vrot.lane.b32.xlu0 %v1119, 94
      %v1134 = vpop.permute.xlu0 %1133
      %1135 = vrot.lane.b32.xlu0 %v1120, 94
      %v1136 = vpop.permute.xlu0 %1135
      %1137 = vrot.lane.b32.xlu0 %v1121, 94
      %v1138 = vpop.permute.xlu0 %1137
      %1139 = vrot.lane.b32.xlu0 %v1122, 94
      %v1140 = vpop.permute.xlu0 %1139
      %v1141 = vsel %vm649, %v1130, %v1132
      %v1142 = vsel %vm649, %v1132, %v1134
      %v1143 = vsel %vm649, %v1136, %v1138
      %v1144 = vsel %vm649, %v1138, %v1140
      %1149 = vst [vmem:[#allocation2 + $0x100] sm:$0xff] %v1141
      %1150 = vst [vmem:[#allocation2 + $0x108] sm:$0xff] %v1142
      %1151 = vst [vmem:[#allocation2 + $0x110] sm:$0xff] %v1143
      %1152 = vst [vmem:[#allocation2 + $0x118] sm:$0xff] %v1144
      %v1153 = vld [vmem:[%s3] sm:$0xff]
      %v1154 = vld [vmem:[%s3 + $0x8] sm:$0xf]
      %v1155 = vld [vmem:[%s3 + $0xc] sm:$0xff]
      %v1156 = vld [vmem:[%s3 + $0x14] sm:$0xf]
      %v1157 = vld [vmem:[%s3 + $0x18] sm:$0xff]
      %v1158 = vld [vmem:[%s3 + $0x20] sm:$0xf]
      %v1159 = vld [vmem:[%s3 + $0x24] sm:$0xff]
      %v1160 = vld [vmem:[%s3 + $0x2c] sm:$0xf]
      %v1161 = vld [vmem:[#allocation2] sm:$0xff]
      %v1162 = vld [vmem:[#allocation2 + $0x8] sm:$0xff]
      %v1163 = vld [vmem:[#allocation2 + $0x10] sm:$0xff]
      %v1164 = vld [vmem:[#allocation2 + $0x18] sm:$0xff]
      %v1165 = vld [vmem:[#allocation2 + $0x20] sm:$0xff]
      %v1166 = vld [vmem:[#allocation2 + $0x28] sm:$0xff]
      %v1167 = vld [vmem:[#allocation2 + $0x30] sm:$0xff]
      %v1168 = vld [vmem:[#allocation2 + $0x38] sm:$0xff]
      %v1169 = vld [vmem:[#allocation2 + $0x40] sm:$0xff]
      %v1170 = vld [vmem:[#allocation2 + $0x48] sm:$0xff]
      %v1171 = vld [vmem:[#allocation2 + $0x50] sm:$0xff]
      %v1172 = vld [vmem:[#allocation2 + $0x58] sm:$0xff]
      %v1173 = vld [vmem:[#allocation2 + $0x60] sm:$0xff]
      %v1174 = vld [vmem:[#allocation2 + $0x68] sm:$0xff]
      %v1175 = vld [vmem:[#allocation2 + $0x70] sm:$0xff]
      %v1176 = vld [vmem:[#allocation2 + $0x78] sm:$0xff]
      %v1177 = vld [vmem:[#allocation2 + $0x80] sm:$0xff]
      %v1178 = vld [vmem:[#allocation2 + $0x88] sm:$0xff]
      %v1179 = vld [vmem:[#allocation2 + $0x90] sm:$0xff]
      %v1180 = vld [vmem:[#allocation2 + $0x98] sm:$0xff]
      %v1181 = vld [vmem:[#allocation2 + $0xa0] sm:$0xff]
      %v1182 = vld [vmem:[#allocation2 + $0xa8] sm:$0xff]
      %v1183 = vld [vmem:[#allocation2 + $0xb0] sm:$0xff]
      %v1184 = vld [vmem:[#allocation2 + $0xb8] sm:$0xff]
      %v1185 = vld [vmem:[#allocation2 + $0xc0] sm:$0xff]
      %v1186 = vld [vmem:[#allocation2 + $0xc8] sm:$0xff]
      %v1187 = vld [vmem:[#allocation2 + $0xd0] sm:$0xff]
      %v1188 = vld [vmem:[#allocation2 + $0xd8] sm:$0xff]
      %v1189 = vld [vmem:[#allocation2 + $0xe0] sm:$0xff]
      %v1190 = vld [vmem:[#allocation2 + $0xe8] sm:$0xff]
      %v1191 = vld [vmem:[#allocation2 + $0xf0] sm:$0xff]
      %v1192 = vld [vmem:[#allocation2 + $0xf8] sm:$0xff]
      %v1193 = vld [vmem:[#allocation2 + $0x100] sm:$0xff]
      %v1194 = vld [vmem:[#allocation2 + $0x108] sm:$0xff]
      %v1195 = vld [vmem:[#allocation2 + $0x110] sm:$0xff]
      %v1196 = vld [vmem:[#allocation2 + $0x118] sm:$0xff]
      %v1205 = vunpack.c.l.b16 %v1153
      %v1206 = vunpack.c.h.b16 %v1153
      %v1207 = vunpack.c.l.b16 %v1154
      %v1208 = vunpack.c.l.b16 %v1155
      %v1209 = vunpack.c.h.b16 %v1155
      %v1210 = vunpack.c.l.b16 %v1156
      %v1211 = vunpack.c.l.b16 %v1157
      %v1212 = vunpack.c.h.b16 %v1157
      %v1213 = vunpack.c.l.b16 %v1158
      %v1214 = vunpack.c.l.b16 %v1159
      %v1215 = vunpack.c.h.b16 %v1159
      %v1216 = vunpack.c.l.b16 %v1160
      %v1217 = vpack.c.b16 %v1208, %v1205
      %v1218 = vpack.c.b16 %v1209, %v1206
      %v1219 = vpack.c.b16 %v1210, %v1207
      %v1220 = vpack.c.b16 %v1214, %v1211
      %v1221 = vpack.c.b16 %v1215, %v1212
      %v1222 = vpack.c.b16 %v1216, %v1213
      %v1228 = vsel %vm736, %v1219, 0
      %v1231 = vsel %vm736, %v1222, 0
      %1233 = vmatprep.subr.bf16.mxu0 %v1162
      %1234 = vmatpush1.bf16.msra.mxu0 %v1161
      %1235 = vmatprep.subr.bf16.mxu0 %v1164
      %1236 = vmatpush1.bf16.msra.mxu0 %v1163
      %1237 = vmatprep.subr.bf16.mxu0 %v1166
      %1238 = vmatpush1.bf16.msra.mxu0 %v1165
      %1239 = vmatprep.subr.bf16.mxu0 %v1168
      %1240 = vmatpush1.bf16.msra.mxu0 %v1167
      %1241 = vmatprep.subr.bf16.mxu0 %v1170
      %1242 = vmatpush1.bf16.msra.mxu0 %v1169
      %1243 = vmatprep.subr.bf16.mxu0 %v1172
      %1244 = vmatpush1.bf16.msra.mxu0 %v1171
      %1245 = vmatprep.subr.bf16.mxu0 %v1174
      %1246 = vmatpush1.bf16.msra.mxu0 %v1173
      %1247 = vmatprep.subr.bf16.mxu0 %v1176
      %1248 = vmatpush1.bf16.msra.mxu0 %v1175
      %1249 = vmatprep.subr.bf16.mxu0 %v1178
      %1250 = vmatpush1.bf16.msra.mxu0 %v1177
      %1251 = vmatprep.subr.bf16.mxu0 %v1180
      %1252 = vmatpush1.bf16.msra.mxu0 %v1179
      %1253 = vmatprep.subr.bf16.mxu0 %v1182
      %1254 = vmatpush1.bf16.msra.mxu0 %v1181
      %1255 = vmatprep.subr.bf16.mxu0 %v1184
      %1256 = vmatpush1.bf16.msra.mxu0 %v1183
      %1257 = vmatprep.subr.bf16.mxu0 %v1186
      %1258 = vmatpush1.bf16.msra.mxu0 %v1185
      %1259 = vmatprep.subr.bf16.mxu0 %v1188
      %1260 = vmatpush1.bf16.msra.mxu0 %v1187
      %1261 = vmatprep.subr.bf16.mxu0 %v1190
      %1262 = vmatpush1.bf16.msra.mxu0 %v1189
      %1263 = vmatprep.subr.bf16.mxu0 %v1192
      %1264 = vmatpush1.bf16.msra.mxu0 %v1191
      %1265 = vmatprep.mubr.bf16.mxu0 %v1218
      %1266 = vmatmul.mubr.bf16.gmra.mrb[0].mxu0 %v1217
      %v1267 = vpop.f32.mrb[0].mxu0
      %v1268 = vadd.f32 0.0, %v1267
      %v1269 = vpop.f32.mrb[0].mxu0
      %v1270 = vadd.f32 0.0, %v1269
      %v1271 = vpop.f32.mrb[0].mxu0
      %v1272 = vadd.f32 0.0, %v1271
      %v1273 = vpop.f32.mrb[0].mxu0
      %v1274 = vadd.f32 0.0, %v1273
      %1275 = vmatprep.mubr.bf16.mxu0 %v1221
      %1276 = vmatmul.mubr.bf16.gmra.mrb[0].mxu0 %v1220
      %v1277 = vpop.f32.mrb[0].mxu0
      %v1278 = vadd.f32 0.0, %v1277
      %v1279 = vpop.f32.mrb[0].mxu0
      %v1280 = vadd.f32 0.0, %v1279
      %v1281 = vpop.f32.mrb[0].mxu0
      %v1282 = vadd.f32 0.0, %v1281
      %v1283 = vpop.f32.mrb[0].mxu0
      %v1284 = vadd.f32 0.0, %v1283
      %1285 = vdwg.mxu0
      %1286 = vmatprep.subr.bf16.mxu0 %v1194
      %1287 = vmatpush1.bf16.msra.mxu0 %v1193
      %1288 = vmatprep.subr.bf16.mxu0 %v1196
      %1289 = vmatpush1.bf16.msra.mxu0 %v1195
      %1290 = vmatprep.subr.bf16.mxu0 0
      %1291 = vmatpush1.bf16.msra.mxu0 0
      %1292 = vmatprep.subr.bf16.mxu0 0
      %1293 = vmatpush1.bf16.msra.mxu0 0
      %1294 = vmatprep.subr.bf16.mxu0 0
      %1295 = vmatpush1.bf16.msra.mxu0 0
      %1296 = vmatprep.subr.bf16.mxu0 0
      %1297 = vmatpush1.bf16.msra.mxu0 0
      %1298 = vmatprep.subr.bf16.mxu0 0
      %1299 = vmatpush1.bf16.msra.mxu0 0
      %1300 = vmatprep.subr.bf16.mxu0 0
      %1301 = vmatpush1.bf16.msra.mxu0 0
      %1302 = vmatprep.subr.bf16.mxu0 0
      %1303 = vmatpush1.bf16.msra.mxu0 0
      %1304 = vmatprep.subr.bf16.mxu0 0
      %1305 = vmatpush1.bf16.msra.mxu0 0
      %1306 = vmatprep.subr.bf16.mxu0 0
      %1307 = vmatpush1.bf16.msra.mxu0 0
      %1308 = vmatprep.subr.bf16.mxu0 0
      %1309 = vmatpush1.bf16.msra.mxu0 0
      %1310 = vmatprep.subr.bf16.mxu0 0
      %1311 = vmatpush1.bf16.msra.mxu0 0
      %1312 = vmatprep.subr.bf16.mxu0 0
      %1313 = vmatpush1.bf16.msra.mxu0 0
      %1314 = vmatprep.subr.bf16.mxu0 0
      %1315 = vmatpush1.bf16.msra.mxu0 0
      %1316 = vmatprep.subr.bf16.mxu0 0
      %1317 = vmatpush1.bf16.msra.mxu0 0
      %1318 = vmatprep.mubr.bf16.mxu0 0
      %1319 = vmatmul.mubr.bf16.gmra.mrb[0].mxu0 %v1228
      %v1320 = vpop.f32.mrb[0].mxu0
      %v1321 = vadd.f32 %v1268, %v1320
      %v1322 = vpop.f32.mrb[0].mxu0
      %v1323 = vadd.f32 %v1270, %v1322
      %v1324 = vpop.f32.mrb[0].mxu0
      %v1325 = vadd.f32 %v1272, %v1324
      %v1326 = vpop.f32.mrb[0].mxu0
      %v1327 = vadd.f32 %v1274, %v1326
      %1328 = vmatprep.mubr.bf16.mxu0 0
      %1329 = vmatmul.mubr.bf16.gmra.mrb[0].mxu0 %v1231
      %v1330 = vpop.f32.mrb[0].mxu0
      %v1331 = vadd.f32 %v1278, %v1330
      %v1332 = vpop.f32.mrb[0].mxu0
      %v1333 = vadd.f32 %v1280, %v1332
      %v1334 = vpop.f32.mrb[0].mxu0
      %v1335 = vadd.f32 %v1282, %v1334
      %v1336 = vpop.f32.mrb[0].mxu0
      %v1337 = vadd.f32 %v1284, %v1336
      %1338 = vdwg.mxu0
      %v1339 = vadd.f32 %v1321, %v1323
      %1340 = vadd.xlane.f32.xlu0 %v1339
      %v1341 = vpop.xlane.xlu0 %1340
      %v1342 = vadd.f32 %v1325, %v1327
      %1343 = vadd.xlane.f32.xlu0 %v1342
      %v1344 = vpop.xlane.xlu0 %1343
      %v1345 = vadd.f32 %v1331, %v1333
      %1346 = vadd.xlane.f32.xlu0 %v1345
      %v1347 = vpop.xlane.xlu0 %1346
      %v1348 = vadd.f32 %v1335, %v1337
      %1349 = vadd.xlane.f32.xlu0 %v1348
      %v1350 = vpop.xlane.xlu0 %1349
      %v1351 = vrcp.pop 256.0
      %v1352 = vmul.f32 %v1341, %v1351
      %v1353 = vmul.f32 %v1344, %v1351
      %v1354 = vmul.f32 %v1347, %v1351
      %v1355 = vmul.f32 %v1350, %v1351
      %v1356 = vld [vmem:[%s4] sm:$0xff]
      %v1358 = vsel %vm736, %v1356, 0
      %1360 = vmatprep.subr.mxu0 0.0
      %1361 = vmatpush1.msra.mxu0 %v1352
      %1362 = vmatprep.subr.mxu0 0.0
      %1363 = vmatpush1.msra.mxu0 %v1353
      %1364 = vmatprep.subr.mxu0 0.0
      %1365 = vmatpush1.msra.mxu0 %v1354
      %1366 = vmatprep.subr.mxu0 0.0
      %1367 = vmatpush1.msra.mxu0 %v1355
      %1368 = vmatprep.subr.mxu0 0.0
      %1369 = vmatpush1.msra.mxu0 0.0
      %1370 = vmatprep.subr.mxu0 0.0
      %1371 = vmatpush1.msra.mxu0 0.0
      %1372 = vmatprep.subr.mxu0 0.0
      %1373 = vmatpush1.msra.mxu0 0.0
      %1374 = vmatprep.subr.mxu0 0.0
      %1375 = vmatpush1.msra.mxu0 0.0
      %1376 = vmatprep.subr.mxu0 0.0
      %1377 = vmatpush1.msra.mxu0 0.0
      %1378 = vmatprep.subr.mxu0 0.0
      %1379 = vmatpush1.msra.mxu0 0.0
      %1380 = vmatprep.subr.mxu0 0.0
      %1381 = vmatpush1.msra.mxu0 0.0
      %1382 = vmatprep.subr.mxu0 0.0
      %1383 = vmatpush1.msra.mxu0 0.0
      %1384 = vmatprep.subr.mxu0 0.0
      %1385 = vmatpush1.msra.mxu0 0.0
      %1386 = vmatprep.subr.mxu0 0.0
      %1387 = vmatpush1.msra.mxu0 0.0
      %1388 = vmatprep.subr.mxu0 0.0
      %1389 = vmatpush1.msra.mxu0 0.0
      %1390 = vmatprep.subr.mxu0 0.0
      %1391 = vmatpush1.msra.mxu0 0.0
      %1392 = vmatprep.subr.mxu0 0.0
      %1393 = vmatpush1.msra.mxu0 0.0
      %1394 = vmatprep.subr.mxu0 0.0
      %1395 = vmatpush1.msra.mxu0 0.0
      %1396 = vmatprep.subr.mxu0 0.0
      %1397 = vmatpush1.msra.mxu0 0.0
      %1398 = vmatprep.subr.mxu0 0.0
      %1399 = vmatpush1.msra.mxu0 0.0
      %1400 = vmatprep.subr.mxu0 0.0
      %1401 = vmatpush1.msra.mxu0 0.0
      %1402 = vmatprep.subr.mxu0 0.0
      %1403 = vmatpush1.msra.mxu0 0.0
      %1404 = vmatprep.subr.mxu0 0.0
      %1405 = vmatpush1.msra.mxu0 0.0
      %1406 = vmatprep.subr.mxu0 0.0
      %1407 = vmatpush1.msra.mxu0 0.0
      %1408 = vmatprep.subr.mxu0 0.0
      %1409 = vmatpush1.msra.mxu0 0.0
      %1410 = vmatprep.subr.mxu0 0.0
      %1411 = vmatpush1.msra.mxu0 0.0
      %1412 = vmatprep.subr.mxu0 0.0
      %1413 = vmatpush1.msra.mxu0 0.0
      %1414 = vmatprep.subr.mxu0 0.0
      %1415 = vmatpush1.msra.mxu0 0.0
      %1416 = vmatprep.subr.mxu0 0.0
      %1417 = vmatpush1.msra.mxu0 0.0
      %1418 = vmatprep.subr.mxu0 0.0
      %1419 = vmatpush1.msra.mxu0 0.0
      %1420 = vmatprep.subr.mxu0 0.0
      %1421 = vmatpush1.msra.mxu0 0.0
      %1422 = vmatprep.subr.mxu0 0.0
      %1423 = vmatpush1.msra.mxu0 0.0
      %1424 = vmatprep.mubr.f32.mxu0 0.0
      %1425 = vmatmul.mubr.f32.gmra.mrb[0].mxu0 %v1358
      %v1426 = vpop.f32.mrb[0].mxu0
      %v1427 = vadd.f32 0.0, %v1426
      %v1428 = vpop.f32.mrb[0].mxu0
      %1429 = vdwg.mxu0
      %v1430 = vmax.f32 %v1427, 0.0
      %v1431 = vld [vmem:[%s5] sm:$0xff]
      %v1432 = vld [vmem:[%s5 + $0x8] sm:$0xff]
      %v1433 = vld [vmem:[%s5 + $0x10] sm:$0xff]
      %v1434 = vld [vmem:[%s5 + $0x18] sm:$0xff]
      %vm1435 = vcmask 64512
      %v1437 = vsel %vm1435, %v1431, 0
      %v1440 = vsel %vm1435, %v1432, 0
      %v1443 = vsel %vm1435, %v1433, 0
      %v1446 = vsel %vm1435, %v1434, 0
      %1448 = vmatprep.subr.mxu0 0.0
      %1449 = vmatpush1.msra.mxu0 %v1430
      %1450 = vmatprep.subr.mxu0 0.0
      %1451 = vmatpush1.msra.mxu0 0.0
      %1452 = vmatprep.subr.mxu0 0.0
      %1453 = vmatpush1.msra.mxu0 0.0
      %1454 = vmatprep.subr.mxu0 0.0
      %1455 = vmatpush1.msra.mxu0 0.0
      %1456 = vmatprep.subr.mxu0 0.0
      %1457 = vmatpush1.msra.mxu0 0.0
      %1458 = vmatprep.subr.mxu0 0.0
      %1459 = vmatpush1.msra.mxu0 0.0
      %1460 = vmatprep.subr.mxu0 0.0
      %1461 = vmatpush1.msra.mxu0 0.0
      %1462 = vmatprep.subr.mxu0 0.0
      %1463 = vmatpush1.msra.mxu0 0.0
      %1464 = vmatprep.subr.mxu0 0.0
      %1465 = vmatpush1.msra.mxu0 0.0
      %1466 = vmatprep.subr.mxu0 0.0
      %1467 = vmatpush1.msra.mxu0 0.0
      %1468 = vmatprep.subr.mxu0 0.0
      %1469 = vmatpush1.msra.mxu0 0.0
      %1470 = vmatprep.subr.mxu0 0.0
      %1471 = vmatpush1.msra.mxu0 0.0
      %1472 = vmatprep.subr.mxu0 0.0
      %1473 = vmatpush1.msra.mxu0 0.0
      %1474 = vmatprep.subr.mxu0 0.0
      %1475 = vmatpush1.msra.mxu0 0.0
      %1476 = vmatprep.subr.mxu0 0.0
      %1477 = vmatpush1.msra.mxu0 0.0
      %1478 = vmatprep.subr.mxu0 0.0
      %1479 = vmatpush1.msra.mxu0 0.0
      %1480 = vmatprep.subr.mxu0 0.0
      %1481 = vmatpush1.msra.mxu0 0.0
      %1482 = vmatprep.subr.mxu0 0.0
      %1483 = vmatpush1.msra.mxu0 0.0
      %1484 = vmatprep.subr.mxu0 0.0
      %1485 = vmatpush1.msra.mxu0 0.0
      %1486 = vmatprep.subr.mxu0 0.0
      %1487 = vmatpush1.msra.mxu0 0.0
      %1488 = vmatprep.subr.mxu0 0.0
      %1489 = vmatpush1.msra.mxu0 0.0
      %1490 = vmatprep.subr.mxu0 0.0
      %1491 = vmatpush1.msra.mxu0 0.0
      %1492 = vmatprep.subr.mxu0 0.0
      %1493 = vmatpush1.msra.mxu0 0.0
      %1494 = vmatprep.subr.mxu0 0.0
      %1495 = vmatpush1.msra.mxu0 0.0
      %1496 = vmatprep.subr.mxu0 0.0
      %1497 = vmatpush1.msra.mxu0 0.0
      %1498 = vmatprep.subr.mxu0 0.0
      %1499 = vmatpush1.msra.mxu0 0.0
      %1500 = vmatprep.subr.mxu0 0.0
      %1501 = vmatpush1.msra.mxu0 0.0
      %1502 = vmatprep.subr.mxu0 0.0
      %1503 = vmatpush1.msra.mxu0 0.0
      %1504 = vmatprep.subr.mxu0 0.0
      %1505 = vmatpush1.msra.mxu0 0.0
      %1506 = vmatprep.subr.mxu0 0.0
      %1507 = vmatpush1.msra.mxu0 0.0
      %1508 = vmatprep.subr.mxu0 0.0
      %1509 = vmatpush1.msra.mxu0 0.0
      %1510 = vmatprep.subr.mxu0 0.0
      %1511 = vmatpush1.msra.mxu0 0.0
      %1512 = vmatprep.mubr.f32.mxu0 0.0
      %1513 = vmatmul.mubr.f32.gmra.mrb[0].mxu0 %v1437
      %v1514 = vpop.f32.mrb[0].mxu0
      %v1515 = vadd.f32 0.0, %v1514
      %v1516 = vpop.f32.mrb[0].mxu0
      %1517 = vmatprep.mubr.f32.mxu0 0.0
      %1518 = vmatmul.mubr.f32.gmra.mrb[0].mxu0 %v1440
      %v1519 = vpop.f32.mrb[0].mxu0
      %v1520 = vadd.f32 0.0, %v1519
      %v1521 = vpop.f32.mrb[0].mxu0
      %1522 = vmatprep.mubr.f32.mxu0 0.0
      %1523 = vmatmul.mubr.f32.gmra.mrb[0].mxu0 %v1443
      %v1524 = vpop.f32.mrb[0].mxu0
      %v1525 = vadd.f32 0.0, %v1524
      %v1526 = vpop.f32.mrb[0].mxu0
      %1527 = vmatprep.mubr.f32.mxu0 0.0
      %1528 = vmatmul.mubr.f32.gmra.mrb[0].mxu0 %v1446
      %v1529 = vpop.f32.mrb[0].mxu0
      %v1530 = vadd.f32 0.0, %v1529
      %v1531 = vpop.f32.mrb[0].mxu0
      %1532 = vdwg.mxu0
      %v1533 = vxor.u32 %v1515, 2147483648
      %v1534 = vxor.u32 %v1520, 2147483648
      %v1535 = vxor.u32 %v1525, 2147483648
      %v1536 = vxor.u32 %v1530, 2147483648
      %v1537 = vmul.f32 %v1533, 1.442695
      %v1538 = vpow.pop %v1537
      %v1539 = vmul.f32 %v1534, 1.442695
      %v1540 = vpow.pop %v1539
      %v1541 = vmul.f32 %v1535, 1.442695
      %v1542 = vpow.pop %v1541
      %v1543 = vmul.f32 %v1536, 1.442695
      %v1544 = vpow.pop %v1543
      %v1545 = vadd.f32 %v1538, 1.0
      %v1546 = vadd.f32 %v1540, 1.0
      %v1547 = vadd.f32 %v1542, 1.0
      %v1548 = vadd.f32 %v1544, 1.0
      %v1549 = vrcp.pop %v1545
      %v1550 = vmul.f32 1.0, %v1549
      %v1551 = vrcp.pop %v1546
      %v1552 = vmul.f32 1.0, %v1551
      %v1553 = vrcp.pop %v1547
      %v1554 = vmul.f32 1.0, %v1553
      %v1555 = vrcp.pop %v1548
      %v1556 = vmul.f32 1.0, %v1555
      %1558 = vset.pattern.permute.xlu0 0
      %1559 = vperm.xlu0 %1558, %v1550
      %v1560 = vpop.permute.xlu0 %1559
      %1563 = vset.pattern.permute.xlu0 0
      %1564 = vperm.xlu0 %1563, %v1552
      %v1565 = vpop.permute.xlu0 %1564
      %1568 = vset.pattern.permute.xlu0 0
      %1569 = vperm.xlu0 %1568, %v1554
      %v1570 = vpop.permute.xlu0 %1569
      %1573 = vset.pattern.permute.xlu0 0
      %1574 = vperm.xlu0 %1573, %v1556
      %v1575 = vpop.permute.xlu0 %1574
      %v1577 = vmul.f32 %v1321, %v1560
      %v1578 = vmul.f32 %v1323, %v1560
      %v1579 = vmul.f32 %v1325, %v1565
      %v1580 = vmul.f32 %v1327, %v1565
      %v1581 = vmul.f32 %v1331, %v1570
      %v1582 = vmul.f32 %v1333, %v1570
      %v1583 = vmul.f32 %v1335, %v1575
      %v1584 = vmul.f32 %v1337, %v1575
      %v1585 = vld [vmem:[%s246] sm:$0xff]
      %v1586 = vld [vmem:[%s246 + $0x8] sm:$0xff]
      %v1587 = vld [vmem:[%s246 + $0x10] sm:$0xff]
      %v1588 = vld [vmem:[%s246 + $0x18] sm:$0xff]
      %v1589 = vld [vmem:[%s246 + $0x20] sm:$0xff]
      %v1590 = vld [vmem:[%s246 + $0x28] sm:$0xff]
      %v1591 = vld [vmem:[%s246 + $0x30] sm:$0xff]
      %v1592 = vld [vmem:[%s246 + $0x38] sm:$0xff]
      %v1593 = vadd.f32 %v1577, %v1585
      %v1594 = vadd.f32 %v1578, %v1586
      %v1595 = vadd.f32 %v1579, %v1587
      %v1596 = vadd.f32 %v1580, %v1588
      %v1597 = vadd.f32 %v1581, %v1589
      %v1598 = vadd.f32 %v1582, %v1590
      %v1599 = vadd.f32 %v1583, %v1591
      %v1600 = vadd.f32 %v1584, %v1592
      %1601 = vst [vmem:[%s251] sm:$0xff] %v1593
      %1602 = vst [vmem:[%s251 + $0x8] sm:$0xff] %v1594
      %1603 = vst [vmem:[%s251 + $0x10] sm:$0xff] %v1595
      %1604 = vst [vmem:[%s251 + $0x18] sm:$0xff] %v1596
      %1605 = vst [vmem:[%s251 + $0x20] sm:$0xff] %v1597
      %1606 = vst [vmem:[%s251 + $0x28] sm:$0xff] %v1598
      %1607 = vst [vmem:[%s251 + $0x30] sm:$0xff] %v1599
      %1608 = vst [vmem:[%s251 + $0x38] sm:$0xff] %v1600
      %p1609 = scmp.lt.s32.totalorder %s17, 1
      %s1610 = scalar_select %p1609, %s17, 1
      %s1611 = smul.addr %s1610, 8
      %s1612 = smul.addr %s1611, 8
      %s1613 = scalar_lea.vmem %s6, %s1612
      // Predicated region
      $region45: #{cab_forward.1} parent=43 // pred_check
        %p1614 = pneg %p166
      $region46: #{cab_forward.1} parent=43 // pred_check_branch
        %1616 = sbr.rel (%p1614) target = $region48
      $region47: #{cab_forward.1} parent=43 // pred_region
        _
      $region48: #{cab_forward.1} parent=43 // pred_fallthru
        _
    $region44: #{cab_forward.1} parent=5 // pred_fallthru
      _
    %p1617 = scmp.le.s32.totalorder 2, %s12
    // Predicated region
    $region49: #{cab_forward.1} parent=5 // pred_check
      %p1618 = pneg %p1617
    $region50: #{cab_forward.1} parent=5 // pred_check_branch
      %1620 = sbr.rel (%p1618) target = $region52
    $region51: #{cab_forward.1} parent=5 // pred_region
      %s1621 = ssub.s32 %s12, 2
      // Predicated region
      $region53: #{cab_forward.1} parent=51 // pred_check
        %p1622 = pneg %p172
      $region54: #{cab_forward.1} parent=51 // pred_check_branch
        %1624 = sbr.rel (%p1622) target = $region56
      $region55: #{cab_forward.1} parent=51 // pred_region
        %p1625 = scmp.lt.s32.totalorder %s18, 1
        %s1626 = scalar_select %p1625, %s18, 1
        %s1627 = smul.addr %s1626, 8
        %s1628 = smul.addr %s1627, 8
        %s1629 = scalar_lea.vmem %s6, %s1628
      $region56: #{cab_forward.1} parent=51 // pred_fallthru
        _
    $region52: #{cab_forward.1} parent=5 // pred_fallthru
      _
  $region6: #{cab_forward.1} parent=0 // loop_footer
    %s16 = sadd.s32 1, %s12
  $region7: #{cab_forward.1} parent=0 // loop_footer_branch
    %11 = sbr.rel target = $region3
  $region8: #{cab_forward.1} parent=0 // loop_exit
    _

</llo_original>
